<compile_context>
chip_gen: v7x
topology: tpu7x:2x2x1
jax: 0.10.0
libtpu: 0.0.40
codegen_flags: <defaults>
</compile_context>

<pallas_src>
import functools

import jax
import jax.numpy as jnp
import numpy as np
from jax import lax
from jax.experimental import pallas as pl
from jax.experimental.pallas import tpu as pltpu


def _pick_tile(n, candidates):
    """First candidate that divides n (and is <= n); else full n."""
    for t in candidates:
        if t <= n and n % t == 0:
            return t
    return n


# ----------------------------------------------------------------------------
# Kernel 1: fused pointwise Q/K/V projections + flash-style attention.
#   grid = (B, N//tq, N//tk);  x tiles are (C, tq) / (C, tk) with N on lanes.
# ----------------------------------------------------------------------------
def _flash_attn_kernel(xq_ref, xk_ref, wq_ref, bq_ref, wkv_ref, bkv_ref,
                       o_ref, q_sc, m_sc, acc_sc, *, ck, cv, tk, n_valid):
    ki = pl.program_id(2)

    @pl.when(ki == 0)
    def _init():
        # Project this query tile once per (b, qi).  1/sqrt(ck) already folded into Wq.
        xq = xq_ref[0]                                                       # (C, tq)
        qT = jnp.dot(wq_ref[...], xq,
                     preferred_element_type=jnp.float32) + bq_ref[...]       # (ck, tq)
        # Single (ck, tq) transpose per q-tile, amortized over all ki steps.
        q_sc[...] = jnp.transpose(qT).astype(q_sc.dtype)                     # (tq, ck)
        m_sc[...] = jnp.full_like(m_sc, -jnp.inf)
        acc_sc[...] = jnp.zeros_like(acc_sc)

    # Fused K / [V ; ones] projection for this key tile (contraction depth C is tiny).
    # The last row of wkv is zeros with bias 1.0, so vT's last row is exactly 1.0 and the
    # P @ vT^T dot computes the softmax denominator on the (otherwise idle) MXU.
    xk = xk_ref[0]                                                           # (C, tk)
    kvT = jnp.dot(wkv_ref[...], xk,
                  preferred_element_type=jnp.float32) + bkv_ref[...]         # (ck+cv+1, tk)
    kT = kvT[:ck, :].astype(jnp.bfloat16)                                    # (ck, tk)
    vT = kvT[ck:, :].astype(jnp.bfloat16)                                    # (cv+1, tk)

    # scores: (tq, tk), bf16 MXU operands, f32 accumulation.
    s = jnp.dot(q_sc[...], kT, preferred_element_type=jnp.float32)

    if n_valid is not None:
        # Static flag: only traced when N was padded.  Mask padded key columns.
        kpos = ki * tk + lax.broadcasted_iota(jnp.int32, (1, tk), 1)
        s = jnp.where(kpos < n_valid, s, -1e30)

    # online softmax (f32 math; exp on the EUP, row-max on the XLU).
    m_prev = m_sc[...]                                                       # (tq, 1)
    m_new = jnp.maximum(m_prev, jnp.max(s, axis=-1, keepdims=True))
    alpha = jnp.exp(m_prev - m_new)
    p = jnp.exp(s - m_new).astype(jnp.bfloat16)                              # (tq, tk)

    # acc += P @ [V ; 1]: columns [:cv] accumulate P@V, column cv accumulates sum(P).
    pv = lax.dot_general(p, vT,
                         dimension_numbers=(((1,), (1,)), ((), ())),
                         preferred_element_type=jnp.float32)                 # (tq, cv+1)
    acc_sc[...] = alpha * acc_sc[...] + pv
    m_sc[...] = m_new

    @pl.when(ki == pl.num_programs(2) - 1)
    def _finalize():
        acc = acc_sc[...]
        inv_l = pl.reciprocal(acc[:, cv:cv + 1], approx=True)
        o_ref[0] = (acc[:, :cv] * inv_l).astype(o_ref.dtype)


def flash_attention(x_bcn, wq, bq, wkv, bkv, *, ck, cv, tq=128, tk=256):
    """x_bcn: (B, C, N); wq: (ck, C) pre-scaled; wkv: (ck+cv+1, C) with a zero/ones-bias
    row appended.  Returns (B, N, cv) bf16."""
    B, C, n_valid = x_bcn.shape
    N = n_valid
    if N % 128 != 0:
        # Pad N to a multiple of 256; padded key columns are masked inside the kernel,
        # padded query rows are sliced off below.
        N = ((N + 255) // 256) * 256
        x_bcn = jnp.pad(x_bcn, ((0, 0), (0, 0), (0, N - n_valid)))
    tq = _pick_tile(N, (tq, 256, 128))
    tk = _pick_tile(N, (tk, 512, 256, 128))
    kv_rows = wkv.shape[0]                         # ck + cv + 1

    kern = functools.partial(_flash_attn_kernel, ck=ck, cv=cv, tk=tk,
                             n_valid=(n_valid if n_valid != N else None))
    grid_spec = pltpu.PrefetchScalarGridSpec(
        num_scalar_prefetch=0,
        grid=(B, N // tq, N // tk),
        in_specs=[
            pl.BlockSpec((1, C, tq), lambda b, qi, ki: (b, 0, qi)),   # x tile for queries
            pl.BlockSpec((1, C, tk), lambda b, qi, ki: (b, 0, ki)),   # x tile for keys/values
            pl.BlockSpec((ck, C), lambda b, qi, ki: (0, 0)),
            pl.BlockSpec((ck, 1), lambda b, qi, ki: (0, 0)),
            pl.BlockSpec((kv_rows, C), lambda b, qi, ki: (0, 0)),
            pl.BlockSpec((kv_rows, 1), lambda b, qi, ki: (0, 0)),
        ],
        out_specs=pl.BlockSpec((1, tq, cv), lambda b, qi, ki: (b, qi, 0)),
        scratch_shapes=[
            pltpu.VMEM((tq, ck), jnp.bfloat16),     # projected query tile
            pltpu.VMEM((tq, 1), jnp.float32),       # running max
            pltpu.VMEM((tq, cv + 1), jnp.float32),  # running [P@V | sum(P)] accumulator
        ],
    )
    out = pl.pallas_call(
        kern,
        out_shape=jax.ShapeDtypeStruct((B, N, cv), jnp.bfloat16),
        grid_spec=grid_spec,
        compiler_params=pltpu.CompilerParams(
            dimension_semantics=("parallel", "parallel", "arbitrary"),
            vmem_limit_bytes=32 * 1024 * 1024,   # explicit; safe on v5e/v6e/v7x
        ),
    )(x_bcn, x_bcn, wq, bq, wkv, bkv)
    return out[:, :n_valid, :] if n_valid != N else out


# ----------------------------------------------------------------------------
# Kernel 2: pointwise (1x1x1) output conv on channel-major data.
#   per (batch, N-tile):  w (Cout, Cin) @ x (Cin, tn) -> (Cout, tn)  (lane-dense store)
#   tn is large (up to 16384) so the memory-bound kernel is not step-overhead dominated.
# ----------------------------------------------------------------------------
def _pointwise_kernel(x_ref, w_ref, b_ref, o_ref):
    x = x_ref[0].astype(jnp.float32)               # bf16 intermediate -> f32 accumulate
    o_ref[0] = (jnp.dot(w_ref[...], x, preferred_element_type=jnp.float32)
                + b_ref[...]).astype(o_ref.dtype)


def pointwise_conv_cn(x_bcn, w, b, *, tn=16384):
    """x_bcn: (B, Cin, N) (any float dtype); w: (Cout, Cin) f32; b: (Cout, 1) f32.
    Returns (B, Cout, N) f32."""
    B, Cin, n_valid = x_bcn.shape
    N = n_valid
    if N % 128 != 0:
        N = ((N + 127) // 128) * 128
        x_bcn = jnp.pad(x_bcn, ((0, 0), (0, 0), (0, N - n_valid)))
    Cout = w.shape[0]
    tn = _pick_tile(N, (tn, 8192, 4096, 2048, 1024, 512, 256, 128))
    grid_spec = pltpu.PrefetchScalarGridSpec(
        num_scalar_prefetch=0,
        grid=(B, N // tn),
        in_specs=[
            pl.BlockSpec((1, Cin, tn), lambda bi, ni: (bi, 0, ni)),
            pl.BlockSpec((Cout, Cin), lambda bi, ni: (0, 0)),
            pl.BlockSpec((Cout, 1), lambda bi, ni: (0, 0)),
        ],
        out_specs=pl.BlockSpec((1, Cout, tn), lambda bi, ni: (bi, 0, ni)),
    )
    out = pl.pallas_call(
        _pointwise_kernel,
        out_shape=jax.ShapeDtypeStruct((B, Cout, N), jnp.float32),
        grid_spec=grid_spec,
        compiler_params=pltpu.CompilerParams(
            dimension_semantics=("parallel", "parallel"),
            vmem_limit_bytes=32 * 1024 * 1024,
        ),
    )(x_bcn, w, b)
    return out[:, :, :n_valid] if n_valid != N else out


# ----------------------------------------------------------------------------
# Full forward.  Only free reshapes + tiny weight prep in plain JAX.
# ----------------------------------------------------------------------------
def global_aggregation_block(x, params, *, ck, cv):
    """x: (B, C, D, H, W) float32  ->  (B, out_channels, D, H, W) float32."""
    B, C, D, H, W = x.shape
    N = D * H * W

    # (B, C, D, H, W) -> (B, C, N): pure row-major reshape, no transpose.
    x_bcn = x.reshape(B, C, N)

    # Fold 1/sqrt(ck) into the query projection; fuse Wk/Wv (+ ones-row for the softmax
    # denominator trick) into one matrix.
    scale = 1.0 / float(ck) ** 0.5
    wq = params["wq"] * scale                                                 # (ck, C)
    bq = (params["bq"] * scale)[:, None]                                      # (ck, 1)
    wkv = jnp.concatenate(
        [params["wk"], params["wv"],
         jnp.zeros((1, C), dtype=params["wk"].dtype)], axis=0)                # (ck+cv+1, C)
    bkv = jnp.concatenate(
        [params["bk"], params["bv"],
         jnp.ones((1,), dtype=params["bk"].dtype)])[:, None]                  # (ck+cv+1, 1)
    wo = params["wo"]                                                         # (Cout, cv)
    bo = params["bo"][:, None]                                                # (Cout, 1)

    # attention output: (B, N, cv) bf16
    attn_out = flash_attention(x_bcn, wq, bq, wkv, bkv, ck=ck, cv=cv)

    # PyTorch does `output.view(batch, cv, dq, hq, wq)` on a contiguous (B, N, cv) tensor:
    # row-major reinterpretation, NOT a transpose.  jnp.reshape matches .view exactly, and
    # the pointwise kernel consumes this (B, cv, N) layout directly.
    out_view = attn_out.reshape(B, cv, N)

    y = pointwise_conv_cn(out_view, wo, bo)   # (B, out_channels, N), lane-dense f32
    return y.reshape(B, -1, D, H, W)


# ----------------------------------------------------------------------------
# Pure-JAX reference (mirrors the PyTorch forward, dropout = identity).
# ----------------------------------------------------------------------------
def reference_forward(x, params, *, ck, cv):
    B, C, D, H, W = x.shape
    N = D * H * W
    xf = x.reshape(B, C, N)

    def pconv(t, w, b):  # t (B, Cin, N), w (Cout, Cin), b (Cout,)
        return jnp.einsum("oc,bcn->bon", w, t) + b[None, :, None]

    q = pconv(xf, params["wq"], params["bq"])            # (B, ck, N)
    k = pconv(xf, params["wk"], params["bk"])            # (B, ck, N)
    v = pconv(xf, params["wv"], params["bv"])            # (B, cv, N)

    attn = jnp.matmul(jnp.transpose(q, (0, 2, 1)), k) / (ck ** 0.5)
    attn = jax.nn.softmax(attn, axis=-1)
    out = jnp.matmul(attn, jnp.transpose(v, (0, 2, 1)))  # (B, N, cv)
    out = out.reshape(B, cv, N)                          # == torch .view(B, cv, D, H, W)
    out = pconv(out, params["wo"], params["bo"])
    return out.reshape(B, -1, D, H, W)


if __name__ == "__main__":
    # Small deterministic setup.
    B, C_in, D, H, W = 2, 4, 8, 8, 8
    ck, cv, C_out = 8, 8, 4

    key = jax.random.PRNGKey(0)
    keys = jax.random.split(key, 9)
    x = jax.random.normal(keys[0], (B, C_in, D, H, W), dtype=jnp.float32)

    params = {
        # query_transform = 'same' -> Conv3d(in, ck, 1); conv_1_ck; conv_1_cv; conv_1_co
        "wq": 0.2 * jax.random.normal(keys[1], (ck, C_in), dtype=jnp.float32),
        "bq": 0.1 * jax.random.normal(keys[2], (ck,), dtype=jnp.float32),
        "wk": 0.2 * jax.random.normal(keys[3], (ck, C_in), dtype=jnp.float32),
        "bk": 0.1 * jax.random.normal(keys[4], (ck,), dtype=jnp.float32),
        "wv": 0.2 * jax.random.normal(keys[5], (cv, C_in), dtype=jnp.float32),
        "bv": 0.1 * jax.random.normal(keys[6], (cv,), dtype=jnp.float32),
        "wo": 0.2 * jax.random.normal(keys[7], (C_out, cv), dtype=jnp.float32),
        "bo": 0.1 * jax.random.normal(keys[8], (C_out,), dtype=jnp.float32),
    }

    out = global_aggregation_block(x, params, ck=ck, cv=cv)
    out = jax.block_until_ready(out)

    ref = reference_forward(x, params, ck=ck, cv=cv)
    ref = jax.block_until_ready(ref)

    assert out.shape == (B, C_out, D, H, W), out.shape
    # bf16 intermediate + bf16 MXU operands (f32 accumulation) -> slightly looser tol.
    np.testing.assert_allclose(np.asarray(out), np.asarray(ref), rtol=5e-3, atol=5e-3)
    print("KERNEL_OK")
</pallas_src>

<mosaic_0001>
module attributes {stable_mosaic.version = 11 : i64} {
  func.func @_flash_attn_kernel(%arg0: i32, %arg1: i32, %arg2: i32, %arg3: memref<1x4x128xf32, #tpu.memory_space<vmem>>, %arg4: memref<1x4x256xf32, #tpu.memory_space<vmem>>, %arg5: memref<8x4xf32, #tpu.memory_space<vmem>>, %arg6: memref<8x1xf32, #tpu.memory_space<vmem>>, %arg7: memref<17x4xf32, #tpu.memory_space<vmem>>, %arg8: memref<17x1xf32, #tpu.memory_space<vmem>>, %arg9: memref<1x128x8xbf16, #tpu.memory_space<vmem>>, %arg10: memref<128x8xbf16, #tpu.memory_space<vmem>>, %arg11: memref<128x1xf32, #tpu.memory_space<vmem>>, %arg12: memref<128x9xf32, #tpu.memory_space<vmem>>) attributes {dimension_semantics = [#tpu.dimension_semantics<parallel>, #tpu.dimension_semantics<parallel>, #tpu.dimension_semantics<arbitrary>], iteration_bounds = array<i64: 2, 4, 2>, scalar_prefetch = 0 : i64, scratch_operands = 3 : i64, tpu.core_type = #tpu.core_type<tc>, window_params = [{transform_indices = @transform_0, window_bounds = array<i64: 1, 4, 128>}, {transform_indices = @transform_1, window_bounds = array<i64: 1, 4, 256>}, {pipeline_mode = #tpu.pipeline_mode<synchronous>, transform_indices = @transform_2, window_bounds = array<i64: 8, 4>}, {pipeline_mode = #tpu.pipeline_mode<synchronous>, transform_indices = @transform_3, window_bounds = array<i64: 8, 1>}, {pipeline_mode = #tpu.pipeline_mode<synchronous>, transform_indices = @transform_4, window_bounds = array<i64: 17, 4>}, {pipeline_mode = #tpu.pipeline_mode<synchronous>, transform_indices = @transform_5, window_bounds = array<i64: 17, 1>}, {transform_indices = @transform_6, window_bounds = array<i64: 1, 128, 8>}]} {
    %c0_i32 = arith.constant 0 : i32
    %0 = arith.cmpi eq, %arg2, %c0_i32 : i32
    %1 = arith.extui %0 : i1 to i32
    %c0_i32_0 = arith.constant 0 : i32
    %2 = arith.cmpi ne, %1, %c0_i32_0 : i32
    scf.if %2 {
      %c0_21 = arith.constant 0 : index
      %c0_22 = arith.constant 0 : index
      %c0_23 = arith.constant 0 : index
      %36 = vector.load %arg3[%c0_21, %c0_22, %c0_23] : memref<1x4x128xf32, #tpu.memory_space<vmem>>, vector<1x4x128xf32>
      %37 = vector.shape_cast %36 : vector<1x4x128xf32> to vector<4x128xf32>
      %c0_24 = arith.constant 0 : index
      %c0_25 = arith.constant 0 : index
      %38 = vector.load %arg5[%c0_24, %c0_25] : memref<8x4xf32, #tpu.memory_space<vmem>>, vector<8x4xf32>
      %cst_26 = arith.constant dense<0.000000e+00> : vector<8x128xf32>
      %39 = tpu.matmul %38, %37, %cst_26 {dimension_numbers = #tpu.dot_dimension_numbers<[1], [0], [0], [1], [0, 0, 1, 1], [], []>} : vector<8x4xf32>, vector<4x128xf32>, vector<8x128xf32> -> vector<8x128xf32>
      %c0_27 = arith.constant 0 : index
      %c0_28 = arith.constant 0 : index
      %40 = vector.load %arg6[%c0_27, %c0_28] : memref<8x1xf32, #tpu.memory_space<vmem>>, vector<8x1xf32>
      %41 = vector.broadcast %40 : vector<8x1xf32> to vector<8x128xf32>
      %42 = arith.addf %39, %41 : vector<8x128xf32>
      %43 = tpu.transpose %42, [1, 0] : vector<8x128xf32> -> vector<128x8xf32>
      %44 = arith.truncf %43 : vector<128x8xf32> to vector<128x8xbf16>
      %c0_29 = arith.constant 0 : index
      %c0_30 = arith.constant 0 : index
      %45 = vector.load %arg10[%c0_29, %c0_30] : memref<128x8xbf16, #tpu.memory_space<vmem>>, vector<128x8xbf16>
      tpu.vector_store %arg10[%c0_29, %c0_30], %44 {strides = array<i32>} : memref<128x8xbf16, #tpu.memory_space<vmem>>, vector<128x8xbf16>,
      %cst_31 = arith.constant 0xFF800000 : f32
      %46 = vector.broadcast %cst_31 : f32 to vector<128x1xf32>
      %c0_32 = arith.constant 0 : index
      %c0_33 = arith.constant 0 : index
      %47 = vector.load %arg11[%c0_32, %c0_33] : memref<128x1xf32, #tpu.memory_space<vmem>>, vector<128x1xf32>
      tpu.vector_store %arg11[%c0_32, %c0_33], %46 {strides = array<i32>} : memref<128x1xf32, #tpu.memory_space<vmem>>, vector<128x1xf32>,
      %cst_34 = arith.constant 0.000000e+00 : f32
      %48 = vector.broadcast %cst_34 : f32 to vector<128x9xf32>
      %c0_35 = arith.constant 0 : index
      %c0_36 = arith.constant 0 : index
      %49 = vector.load %arg12[%c0_35, %c0_36] : memref<128x9xf32, #tpu.memory_space<vmem>>, vector<128x9xf32>
      tpu.vector_store %arg12[%c0_35, %c0_36], %48 {strides = array<i32>} : memref<128x9xf32, #tpu.memory_space<vmem>>, vector<128x9xf32>,
    } else {
    }
    %c0 = arith.constant 0 : index
    %c0_1 = arith.constant 0 : index
    %c0_2 = arith.constant 0 : index
    %3 = vector.load %arg4[%c0, %c0_1, %c0_2] : memref<1x4x256xf32, #tpu.memory_space<vmem>>, vector<1x4x256xf32>
    %4 = vector.shape_cast %3 : vector<1x4x256xf32> to vector<4x256xf32>
    %c0_3 = arith.constant 0 : index
    %c0_4 = arith.constant 0 : index
    %5 = vector.load %arg7[%c0_3, %c0_4] : memref<17x4xf32, #tpu.memory_space<vmem>>, vector<17x4xf32>
    %cst = arith.constant dense<0.000000e+00> : vector<17x256xf32>
    %6 = tpu.matmul %5, %4, %cst {dimension_numbers = #tpu.dot_dimension_numbers<[1], [0], [0], [1], [0, 0, 1, 1], [], []>} : vector<17x4xf32>, vector<4x256xf32>, vector<17x256xf32> -> vector<17x256xf32>
    %c0_5 = arith.constant 0 : index
    %c0_6 = arith.constant 0 : index
    %7 = vector.load %arg8[%c0_5, %c0_6] : memref<17x1xf32, #tpu.memory_space<vmem>>, vector<17x1xf32>
    %8 = vector.broadcast %7 : vector<17x1xf32> to vector<17x256xf32>
    %9 = arith.addf %6, %8 : vector<17x256xf32>
    %10 = vector.extract_strided_slice %9 {offsets = [0, 0], sizes = [8, 256], strides = [1, 1]} : vector<17x256xf32> to vector<8x256xf32>
    %11 = arith.truncf %10 : vector<8x256xf32> to vector<8x256xbf16>
    %12 = vector.extract_strided_slice %9 {offsets = [8, 0], sizes = [9, 256], strides = [1, 1]} : vector<17x256xf32> to vector<9x256xf32>
    %13 = arith.truncf %12 : vector<9x256xf32> to vector<9x256xbf16>
    %c0_7 = arith.constant 0 : index
    %c0_8 = arith.constant 0 : index
    %14 = vector.load %arg10[%c0_7, %c0_8] : memref<128x8xbf16, #tpu.memory_space<vmem>>, vector<128x8xbf16>
    %cst_9 = arith.constant dense<0.000000e+00> : vector<128x256xf32>
    %15 = tpu.matmul %14, %11, %cst_9 {dimension_numbers = #tpu.dot_dimension_numbers<[1], [0], [0], [1], [0, 0, 1, 1], [], []>} : vector<128x8xbf16>, vector<8x256xbf16>, vector<128x256xf32> -> vector<128x256xf32>
    %c0_10 = arith.constant 0 : index
    %c0_11 = arith.constant 0 : index
    %16 = vector.load %arg11[%c0_10, %c0_11] : memref<128x1xf32, #tpu.memory_space<vmem>>, vector<128x1xf32>
    %cst_12 = arith.constant dense<0xFF800000> : vector<128xf32>
    %17 = vector.multi_reduction <maximumf>, %15, %cst_12 [1] : vector<128x256xf32> to vector<128xf32>
    %18 = vector.shape_cast %17 : vector<128xf32> to vector<128x1xf32>
    %19 = arith.maximumf %16, %18 : vector<128x1xf32>
    %20 = arith.subf %16, %19 : vector<128x1xf32>
    %21 = math.exp %20 : vector<128x1xf32>
    %22 = vector.broadcast %19 : vector<128x1xf32> to vector<128x256xf32>
    %23 = arith.subf %15, %22 : vector<128x256xf32>
    %24 = math.exp %23 : vector<128x256xf32>
    %25 = arith.truncf %24 : vector<128x256xf32> to vector<128x256xbf16>
    %cst_13 = arith.constant dense<0.000000e+00> : vector<128x9xf32>
    %26 = tpu.matmul %25, %13, %cst_13 {dimension_numbers = #tpu.dot_dimension_numbers<[1], [1], [0], [0], [0, 0, 1, 0], [], []>} : vector<128x256xbf16>, vector<9x256xbf16>, vector<128x9xf32> -> vector<128x9xf32>
    %c0_14 = arith.constant 0 : index
    %c0_15 = arith.constant 0 : index
    %27 = vector.load %arg12[%c0_14, %c0_15] : memref<128x9xf32, #tpu.memory_space<vmem>>, vector<128x9xf32>
    %28 = vector.broadcast %21 : vector<128x1xf32> to vector<128x9xf32>
    %29 = arith.mulf %28, %27 : vector<128x9xf32>
    %30 = arith.addf %29, %26 : vector<128x9xf32>
    %c0_16 = arith.constant 0 : index
    %c0_17 = arith.constant 0 : index
    %31 = vector.load %arg12[%c0_16, %c0_17] : memref<128x9xf32, #tpu.memory_space<vmem>>, vector<128x9xf32>
    tpu.vector_store %arg12[%c0_16, %c0_17], %30 {strides = array<i32>} : memref<128x9xf32, #tpu.memory_space<vmem>>, vector<128x9xf32>,
    %c0_18 = arith.constant 0 : index
    %c0_19 = arith.constant 0 : index
    %32 = vector.load %arg11[%c0_18, %c0_19] : memref<128x1xf32, #tpu.memory_space<vmem>>, vector<128x1xf32>
    tpu.vector_store %arg11[%c0_18, %c0_19], %19 {strides = array<i32>} : memref<128x1xf32, #tpu.memory_space<vmem>>, vector<128x1xf32>,
    %c1_i32 = arith.constant 1 : i32
    %33 = arith.cmpi eq, %arg2, %c1_i32 : i32
    %34 = arith.extui %33 : i1 to i32
    %c0_i32_20 = arith.constant 0 : i32
    %35 = arith.cmpi ne, %34, %c0_i32_20 : i32
    scf.if %35 {
      %c0_21 = arith.constant 0 : index
      %c0_22 = arith.constant 0 : index
      %36 = vector.load %arg12[%c0_21, %c0_22] : memref<128x9xf32, #tpu.memory_space<vmem>>, vector<128x9xf32>
      %37 = vector.extract_strided_slice %36 {offsets = [0, 8], sizes = [128, 1], strides = [1, 1]} : vector<128x9xf32> to vector<128x1xf32>
      %38 = tpu.reciprocal %37 {approx = true} : vector<128x1xf32> -> vector<128x1xf32>
      %39 = vector.extract_strided_slice %36 {offsets = [0, 0], sizes = [128, 8], strides = [1, 1]} : vector<128x9xf32> to vector<128x8xf32>
      %40 = vector.broadcast %38 : vector<128x1xf32> to vector<128x8xf32>
      %41 = arith.mulf %39, %40 : vector<128x8xf32>
      %42 = arith.truncf %41 : vector<128x8xf32> to vector<128x8xbf16>
      %c0_23 = arith.constant 0 : index
      %c0_24 = arith.constant 0 : index
      %c0_25 = arith.constant 0 : index
      %43 = vector.load %arg9[%c0_23, %c0_24, %c0_25] : memref<1x128x8xbf16, #tpu.memory_space<vmem>>, vector<1x128x8xbf16>
      %44 = vector.shape_cast %43 : vector<1x128x8xbf16> to vector<128x8xbf16>
      %45 = vector.shape_cast %42 : vector<128x8xbf16> to vector<1x128x8xbf16>
      tpu.vector_store %arg9[%c0_23, %c0_24, %c0_25], %45 {strides = array<i32>} : memref<1x128x8xbf16, #tpu.memory_space<vmem>>, vector<1x128x8xbf16>,
    } else {
    }
    return
  }
  func.func @transform_0(%arg0: i32, %arg1: i32, %arg2: i32) -> (i32, i32, i32) {
    %c0_i32 = arith.constant 0 : i32
    %c0_i32_0 = arith.constant 0 : i32
    return %arg0, %c0_i32, %arg1 : i32, i32, i32
  }
  func.func @transform_1(%arg0: i32, %arg1: i32, %arg2: i32) -> (i32, i32, i32) {
    %c0_i32 = arith.constant 0 : i32
    %c0_i32_0 = arith.constant 0 : i32
    return %arg0, %c0_i32, %arg2 : i32, i32, i32
  }
  func.func @transform_2(%arg0: i32, %arg1: i32, %arg2: i32) -> (i32, i32) {
    %c0_i32 = arith.constant 0 : i32
    %c0_i32_0 = arith.constant 0 : i32
    %c0_i32_1 = arith.constant 0 : i32
    return %c0_i32, %c0_i32_0 : i32, i32
  }
  func.func @transform_3(%arg0: i32, %arg1: i32, %arg2: i32) -> (i32, i32) {
    %c0_i32 = arith.constant 0 : i32
    %c0_i32_0 = arith.constant 0 : i32
    %c0_i32_1 = arith.constant 0 : i32
    return %c0_i32, %c0_i32_0 : i32, i32
  }
  func.func @transform_4(%arg0: i32, %arg1: i32, %arg2: i32) -> (i32, i32) {
    %c0_i32 = arith.constant 0 : i32
    %c0_i32_0 = arith.constant 0 : i32
    %c0_i32_1 = arith.constant 0 : i32
    return %c0_i32, %c0_i32_0 : i32, i32
  }
  func.func @transform_5(%arg0: i32, %arg1: i32, %arg2: i32) -> (i32, i32) {
    %c0_i32 = arith.constant 0 : i32
    %c0_i32_0 = arith.constant 0 : i32
    %c0_i32_1 = arith.constant 0 : i32
    return %c0_i32, %c0_i32_0 : i32, i32
  }
  func.func @transform_6(%arg0: i32, %arg1: i32, %arg2: i32) -> (i32, i32, i32) {
    %c0_i32 = arith.constant 0 : i32
    %c0_i32_0 = arith.constant 0 : i32
    return %arg0, %arg1, %c0_i32 : i32, i32, i32
  }
}

</mosaic_0001>

<llo_original>
// kernel: tpu_custom_call.1
$region0: #{tpu_custom_call.1}
  #allocation0 [shape = 'u32[]', space=smem, size = 0x4, offset = 0x4, fixed_abs, tag = 'smem constant byte address 0x4 - core index']
  #allocation1 [shape = 'u32[144,128]{1,0:T(1,128)}', space=vmem, size = 0x12000, scoped, tag = 'internal scratch']
  #allocation2 [shape = 'bf16[128,8]{1,0:T(16,128)(2,1)}', space=vmem, size = 0x8000, scoped, tag = 'scratch operand']
  #allocation3 [shape = 'f32[128,1]{1,0:T(8,128)}', space=vmem, size = 0x10000, scoped, tag = 'scratch operand']
  #allocation4 [shape = 'f32[128,9]{1,0:T(8,128)}', space=vmem, size = 0x10000, scoped, tag = 'scratch operand']
  %s0 = inlined_call_operand.vmem [shape: f32[2,4,512], index: 0, kind: input, shape index: {}]
  %s1 = inlined_call_operand.vmem [shape: f32[2,4,512], index: 1, kind: input, shape index: {}]
  %s2 = inlined_call_operand.vmem [shape: f32[8,4], index: 2, kind: input, shape index: {}]
  %s3 = inlined_call_operand.vmem [shape: f32[8,1], index: 3, kind: input, shape index: {}]
  %s4 = inlined_call_operand.vmem [shape: f32[17,4], index: 4, kind: input, shape index: {}]
  %s5 = inlined_call_operand.vmem [shape: f32[17,1], index: 5, kind: input, shape index: {}]
  %s6 = inlined_call_operand.vmem [shape: bf16[2,512,8], index: 6, kind: output, shape index: {}]
  %s7 = sld [smem:[#allocation0]]
  $region65: #{tpu_custom_call.1} parent=0
    _
  %s9 = ssub.s32 1, %s7
  %s10 = scalar_select 0, %s9, %s7
  loop: start=0, step=1, limit=18
  $region2: #{tpu_custom_call.1} parent=0 // loop_pre_header
    _
  $region3: #{tpu_custom_call.1} parent=0 // loop_header
    %s12 = sphi 0, %s16
    %p13 = scmp.ge.s32.totalorder %s12, 18
    %s19 = sphi 0, %s38
    %s20 = sphi 0, %s34
    %s21 = sphi 0, %s30
    %s22 = sphi 0, %s19
    %s23 = sphi 0, %s20
    %s24 = sphi 0, %s21
    %s25 = sphi 0, %s22
    %s26 = sphi 0, %s23
    %s27 = sphi 0, %s24
    %s43 = sphi 0, %s45
    %s46 = sphi 0, %s43
    %s47 = sphi 0, %s46
    %s63 = sphi 0, %s47
    %s71 = sphi 0, %s73
    %s74 = sphi 0, %s71
    %s75 = sphi 0, %s74
    %s91 = sphi 0, %s75
    %s95 = sphi 0, %s95
    %s97 = sphi 0, %s95
    %s98 = sphi 0, %s97
    %s112 = sphi 0, %s98
    %s116 = sphi 0, %s116
    %s118 = sphi 0, %s116
    %s119 = sphi 0, %s118
    %s133 = sphi 0, %s119
    %s137 = sphi 0, %s137
    %s139 = sphi 0, %s137
    %s140 = sphi 0, %s139
    %s154 = sphi 0, %s140
    %s158 = sphi 0, %s158
    %s160 = sphi 0, %s158
    %s161 = sphi 0, %s160
    %s175 = sphi 0, %s161
    %s183 = sphi 0, %s185
    %s186 = sphi 0, %s183
    %s187 = sphi 0, %s186
    %s203 = sphi 0, %s187
  $region4: #{tpu_custom_call.1} parent=0 // loop_header_branch
    %15 = sbr.rel (%p13) target = $region8
  $region5: #{tpu_custom_call.1} parent=0 // loop_body
    %s17 = ssub.s32 %s12, 1
    %s18 = ssub.s32 %s12, 2
    %s28 = sadd.s32 1, %s21
    %p29 = scmp.ge.s32.totalorder %s28, 2
    %s30 = scalar_select %p29, 0, %s28
    %s31 = sadd.s32 1, %s20
    %s32 = scalar_select %p29, %s31, %s20
    %p33 = scmp.ge.s32.totalorder %s32, 4
    %s34 = scalar_select %p33, 0, %s32
    %s35 = sadd.s32 1, %s19
    %s36 = scalar_select %p33, %s35, %s19
    %p37 = scmp.ge.s32.totalorder %s36, 2
    %s38 = scalar_select %p37, 0, %s36
    %s39 = ssub.s32 %s19, %s38
    %s40 = ssub.s32 %s20, %s34
    %s41 = sor.u32 %s39, %s40
    %p42 = scmp.eq.s32.totalorder %s41, 0
    %s44 = sadd.s32 %s43, 1
    %s45 = scalar_select %p42, %s43, %s44
    %p48 = pneg %p42
    %p49 = scmp.eq.s32.totalorder %s12, 15
    %p50 = por %p48, %p49
    %p51 = scmp.ne.s32.totalorder %s43, %s46
    %p52 = scmp.eq.s32.totalorder %s12, 0
    %p53 = por %p51, %p52
    %p54 = scmp.ne.s32.totalorder %s43, %s46
    %p55 = scmp.eq.s32.totalorder %s17, 15
    %p56 = por %p54, %p55
    %p57 = scmp.ne.s32.totalorder %s46, %s47
    %p58 = scmp.eq.s32.totalorder %s17, 0
    %p59 = por %p57, %p58
    %p60 = scmp.ne.s32.totalorder %s46, %s47
    %p61 = scmp.eq.s32.totalorder %s18, 15
    %p62 = por %p60, %p61
    %p64 = scmp.ne.s32.totalorder %s47, %s63
    %p65 = scmp.eq.s32.totalorder %s18, 0
    %p66 = por %p64, %p65
    %s67 = ssub.s32 %s19, %s38
    %s68 = ssub.s32 %s21, %s30
    %s69 = sor.u32 %s67, %s68
    %p70 = scmp.eq.s32.totalorder %s69, 0
    %s72 = sadd.s32 %s71, 1
    %s73 = scalar_select %p70, %s71, %s72
    %p76 = pneg %p70
    %p77 = scmp.eq.s32.totalorder %s12, 15
    %p78 = por %p76, %p77
    %p79 = scmp.ne.s32.totalorder %s71, %s74
    %p80 = scmp.eq.s32.totalorder %s12, 0
    %p81 = por %p79, %p80
    %p82 = scmp.ne.s32.totalorder %s71, %s74
    %p83 = scmp.eq.s32.totalorder %s17, 15
    %p84 = por %p82, %p83
    %p85 = scmp.ne.s32.totalorder %s74, %s75
    %p86 = scmp.eq.s32.totalorder %s17, 0
    %p87 = por %p85, %p86
    %p88 = scmp.ne.s32.totalorder %s74, %s75
    %p89 = scmp.eq.s32.totalorder %s18, 15
    %p90 = por %p88, %p89
    %p92 = scmp.ne.s32.totalorder %s75, %s91
    %p93 = scmp.eq.s32.totalorder %s18, 0
    %p94 = por %p92, %p93
    %s96 = sadd.s32 %s95, 1
    %p99 = scmp.eq.s32.totalorder %s12, 15
    %p100 = scmp.ne.s32.totalorder %s95, %s97
    %p101 = scmp.eq.s32.totalorder %s12, 0
    %p102 = por %p100, %p101
    %p103 = scmp.ne.s32.totalorder %s95, %s97
    %p104 = scmp.eq.s32.totalorder %s17, 15
    %p105 = por %p103, %p104
    %p106 = scmp.ne.s32.totalorder %s97, %s98
    %p107 = scmp.eq.s32.totalorder %s17, 0
    %p108 = por %p106, %p107
    %p109 = scmp.ne.s32.totalorder %s97, %s98
    %p110 = scmp.eq.s32.totalorder %s18, 15
    %p111 = por %p109, %p110
    %p113 = scmp.ne.s32.totalorder %s98, %s112
    %p114 = scmp.eq.s32.totalorder %s18, 0
    %p115 = por %p113, %p114
    %s117 = sadd.s32 %s116, 1
    %p120 = scmp.eq.s32.totalorder %s12, 15
    %p121 = scmp.ne.s32.totalorder %s116, %s118
    %p122 = scmp.eq.s32.totalorder %s12, 0
    %p123 = por %p121, %p122
    %p124 = scmp.ne.s32.totalorder %s116, %s118
    %p125 = scmp.eq.s32.totalorder %s17, 15
    %p126 = por %p124, %p125
    %p127 = scmp.ne.s32.totalorder %s118, %s119
    %p128 = scmp.eq.s32.totalorder %s17, 0
    %p129 = por %p127, %p128
    %p130 = scmp.ne.s32.totalorder %s118, %s119
    %p131 = scmp.eq.s32.totalorder %s18, 15
    %p132 = por %p130, %p131
    %p134 = scmp.ne.s32.totalorder %s119, %s133
    %p135 = scmp.eq.s32.totalorder %s18, 0
    %p136 = por %p134, %p135
    %s138 = sadd.s32 %s137, 1
    %p141 = scmp.eq.s32.totalorder %s12, 15
    %p142 = scmp.ne.s32.totalorder %s137, %s139
    %p143 = scmp.eq.s32.totalorder %s12, 0
    %p144 = por %p142, %p143
    %p145 = scmp.ne.s32.totalorder %s137, %s139
    %p146 = scmp.eq.s32.totalorder %s17, 15
    %p147 = por %p145, %p146
    %p148 = scmp.ne.s32.totalorder %s139, %s140
    %p149 = scmp.eq.s32.totalorder %s17, 0
    %p150 = por %p148, %p149
    %p151 = scmp.ne.s32.totalorder %s139, %s140
    %p152 = scmp.eq.s32.totalorder %s18, 15
    %p153 = por %p151, %p152
    %p155 = scmp.ne.s32.totalorder %s140, %s154
    %p156 = scmp.eq.s32.totalorder %s18, 0
    %p157 = por %p155, %p156
    %s159 = sadd.s32 %s158, 1
    %p162 = scmp.eq.s32.totalorder %s12, 15
    %p163 = scmp.ne.s32.totalorder %s158, %s160
    %p164 = scmp.eq.s32.totalorder %s12, 0
    %p165 = por %p163, %p164
    %p166 = scmp.ne.s32.totalorder %s158, %s160
    %p167 = scmp.eq.s32.totalorder %s17, 15
    %p168 = por %p166, %p167
    %p169 = scmp.ne.s32.totalorder %s160, %s161
    %p170 = scmp.eq.s32.totalorder %s17, 0
    %p171 = por %p169, %p170
    %p172 = scmp.ne.s32.totalorder %s160, %s161
    %p173 = scmp.eq.s32.totalorder %s18, 15
    %p174 = por %p172, %p173
    %p176 = scmp.ne.s32.totalorder %s161, %s175
    %p177 = scmp.eq.s32.totalorder %s18, 0
    %p178 = por %p176, %p177
    %s179 = ssub.s32 %s19, %s38
    %s180 = ssub.s32 %s20, %s34
    %s181 = sor.u32 %s179, %s180
    %p182 = scmp.eq.s32.totalorder %s181, 0
    %s184 = sadd.s32 %s183, 1
    %s185 = scalar_select %p182, %s183, %s184
    %p188 = pneg %p182
    %p189 = scmp.eq.s32.totalorder %s12, 15
    %p190 = por %p188, %p189
    %p191 = scmp.ne.s32.totalorder %s183, %s186
    %p192 = scmp.eq.s32.totalorder %s12, 0
    %p193 = por %p191, %p192
    %p194 = scmp.ne.s32.totalorder %s183, %s186
    %p195 = scmp.eq.s32.totalorder %s17, 15
    %p196 = por %p194, %p195
    %p197 = scmp.ne.s32.totalorder %s186, %s187
    %p198 = scmp.eq.s32.totalorder %s17, 0
    %p199 = por %p197, %p198
    %p200 = scmp.ne.s32.totalorder %s186, %s187
    %p201 = scmp.eq.s32.totalorder %s18, 15
    %p202 = por %p200, %p201
    %p204 = scmp.ne.s32.totalorder %s187, %s203
    %p205 = scmp.eq.s32.totalorder %s18, 0
    %p206 = por %p204, %p205
    %p207 = scmp.le.s32.totalorder 1, %s12
    %p208 = scmp.lt.s32.totalorder %s12, 17
    %p209 = pnand %p207, %p208
    %p210 = pneg %p209
    // Predicated region
    $region9: #{tpu_custom_call.1} parent=5 // pred_check
      _
    $region10: #{tpu_custom_call.1} parent=5 // pred_check_branch
      %212 = sbr.rel (%p209) target = $region12
    $region11: #{tpu_custom_call.1} parent=5 // pred_region
      %s213 = ssub.s32 %s12, 1
      // Predicated region
      $region13: #{tpu_custom_call.1} parent=11 // pred_check
        %p214 = pneg %p108
      $region14: #{tpu_custom_call.1} parent=11 // pred_check_branch
        %216 = sbr.rel (%p214) target = $region16
      $region15: #{tpu_custom_call.1} parent=11 // pred_region
        _
      $region16: #{tpu_custom_call.1} parent=11 // pred_fallthru
        _
      // Predicated region
      $region17: #{tpu_custom_call.1} parent=11 // pred_check
        %p217 = pneg %p129
      $region18: #{tpu_custom_call.1} parent=11 // pred_check_branch
        %219 = sbr.rel (%p217) target = $region20
      $region19: #{tpu_custom_call.1} parent=11 // pred_region
        _
      $region20: #{tpu_custom_call.1} parent=11 // pred_fallthru
        _
      // Predicated region
      $region21: #{tpu_custom_call.1} parent=11 // pred_check
        %p220 = pneg %p150
      $region22: #{tpu_custom_call.1} parent=11 // pred_check_branch
        %222 = sbr.rel (%p220) target = $region24
      $region23: #{tpu_custom_call.1} parent=11 // pred_region
        _
      $region24: #{tpu_custom_call.1} parent=11 // pred_fallthru
        _
      // Predicated region
      $region25: #{tpu_custom_call.1} parent=11 // pred_check
        %p223 = pneg %p171
      $region26: #{tpu_custom_call.1} parent=11 // pred_check_branch
        %225 = sbr.rel (%p223) target = $region28
      $region27: #{tpu_custom_call.1} parent=11 // pred_region
        _
      $region28: #{tpu_custom_call.1} parent=11 // pred_fallthru
        _
    $region12: #{tpu_custom_call.1} parent=5 // pred_fallthru
      _
    %p226 = scmp.lt.s32.totalorder %s12, 16
    // Predicated region
    $region29: #{tpu_custom_call.1} parent=5 // pred_check
      %p227 = pneg %p226
    $region30: #{tpu_custom_call.1} parent=5 // pred_check_branch
      %229 = sbr.rel (%p227) target = $region32
    $region31: #{tpu_custom_call.1} parent=5 // pred_region
      // Predicated region
      $region33: #{tpu_custom_call.1} parent=31 // pred_check
        %p230 = pneg %p53
      $region34: #{tpu_custom_call.1} parent=31 // pred_check_branch
        %232 = sbr.rel (%p230) target = $region36
      $region35: #{tpu_custom_call.1} parent=31 // pred_region
        %p233 = scmp.lt.s32.totalorder %s19, 1
        %s234 = scalar_select %p233, %s19, 1
        %p235 = scmp.lt.s32.totalorder %s20, 3
        %s236 = scalar_select %p235, %s20, 3
        %s237 = smul.addr %s234, 4
        %s238 = sadd.s32 %s236, %s237
        %s239 = smul.addr %s238, 4
        %s240 = scalar_lea.vmem %s0, %s239
      $region36: #{tpu_custom_call.1} parent=31 // pred_fallthru
        _
      // Predicated region
      $region37: #{tpu_custom_call.1} parent=31 // pred_check
        %p241 = pneg %p81
      $region38: #{tpu_custom_call.1} parent=31 // pred_check_branch
        %243 = sbr.rel (%p241) target = $region40
      $region39: #{tpu_custom_call.1} parent=31 // pred_region
        %s244 = smul.u32 2, %s21
        %p245 = scmp.lt.s32.totalorder %s19, 1
        %s246 = scalar_select %p245, %s19, 1
        %p247 = scmp.lt.s32.totalorder %s244, 3
        %s248 = scalar_select %p247, %s244, 3
        %s249 = smul.addr %s246, 4
        %s250 = sadd.s32 %s248, %s249
        %s251 = smul.addr %s250, 4
        %s252 = scalar_lea.vmem %s1, %s251
        %s253 = smul.u32 2, %s21
      $region40: #{tpu_custom_call.1} parent=31 // pred_fallthru
        _
    $region32: #{tpu_custom_call.1} parent=5 // pred_fallthru
      _
    %p254 = scmp.le.s32.totalorder 1, %s12
    %p255 = scmp.lt.s32.totalorder %s12, 17
    %p256 = pnand %p254, %p255
    %p257 = pneg %p256
    // Predicated region
    $region41: #{tpu_custom_call.1} parent=5 // pred_check
      _
    $region42: #{tpu_custom_call.1} parent=5 // pred_check_branch
      %259 = sbr.rel (%p256) target = $region44
    $region43: #{tpu_custom_call.1} parent=5 // pred_region
      %s260 = ssub.s32 %s12, 1
      %p261 = scmp.lt.s32.totalorder %s22, 1
      %s262 = scalar_select %p261, %s22, 1
      %p263 = scmp.lt.s32.totalorder %s23, 3
      %s264 = scalar_select %p263, %s23, 3
      %s265 = smul.addr %s262, 4
      %s266 = sadd.s32 %s264, %s265
      %s267 = smul.addr %s266, 4
      %s268 = scalar_lea.vmem %s0, %s267
      %p269 = pneg %p59
      %p270 = pneg %p56
      %s271 = smul.u32 2, %s24
      %p272 = scmp.lt.s32.totalorder %s22, 1
      %s273 = scalar_select %p272, %s22, 1
      %p274 = scmp.lt.s32.totalorder %s271, 3
      %s275 = scalar_select %p274, %s271, 3
      %s276 = smul.addr %s273, 4
      %s277 = sadd.s32 %s275, %s276
      %s278 = smul.addr %s277, 4
      %s279 = scalar_lea.vmem %s1, %s278
      %p280 = pneg %p87
      %p281 = pneg %p84
      %p282 = pneg %p108
      %p283 = pneg %p105
      %p284 = pneg %p129
      %p285 = pneg %p126
      %p286 = pneg %p150
      %p287 = pneg %p147
      %p288 = pneg %p171
      %p289 = pneg %p168
      %p290 = pneg %p199
      %p291 = pneg %p196
      %s292 = smul.u32 16, %s23
      %p293 = scmp.lt.s32.totalorder %s22, 1
      %s294 = scalar_select %p293, %s22, 1
      %p295 = scmp.lt.s32.totalorder %s292, 63
      %s296 = scalar_select %p295, %s292, 63
      %s297 = smul.addr %s294, 64
      %s298 = sadd.s32 %s296, %s297
      %s299 = smul.addr %s298, 4
      %s300 = scalar_lea.vmem %s6, %s299
      %p301 = scmp.lt.s32.totalorder %s22, 1
      %s302 = scalar_select %p301, %s22, 1
      %p303 = scmp.lt.s32.totalorder %s23, 3
      %s304 = scalar_select %p303, %s23, 3
      %s305 = smul.addr %s302, 4
      %s306 = sadd.s32 %s304, %s305
      %s307 = smul.addr %s306, 4
      %s308 = scalar_lea.vmem %s0, %s307
      %s309 = smul.u32 2, %s24
      %p310 = scmp.lt.s32.totalorder %s22, 1
      %s311 = scalar_select %p310, %s22, 1
      %p312 = scmp.lt.s32.totalorder %s309, 3
      %s313 = scalar_select %p312, %s309, 3
      %s314 = smul.addr %s311, 4
      %s315 = sadd.s32 %s313, %s314
      %s316 = smul.addr %s315, 4
      %s317 = scalar_lea.vmem %s1, %s316
      %s318 = smul.u32 2, %s24
      %s319 = smul.u32 16, %s23
      %p320 = scmp.lt.s32.totalorder %s22, 1
      %s321 = scalar_select %p320, %s22, 1
      %p322 = scmp.lt.s32.totalorder %s319, 63
      %s323 = scalar_select %p322, %s319, 63
      %s324 = smul.addr %s321, 64
      %s325 = sadd.s32 %s323, %s324
      %s326 = smul.addr %s325, 4
      %s327 = scalar_lea.vmem %s6, %s326
      %s328 = smul.u32 16, %s23
      %p330 = scmp.eq.s32.totalorder %s24, 0
      // Predicated region
      $region45: #{tpu_custom_call.1} parent=43 // pred_check
        %p331 = pneg %p330
      $region46: #{tpu_custom_call.1} parent=43 // pred_check_branch
        %333 = sbr.rel (%p331) target = $region48
      $region47: #{tpu_custom_call.1} parent=43 // pred_region
        %v334 = vld [vmem:[%s308] sm:$0xf]
        %v335 = vld [vmem:[%s2] sm:$0xff]
        %v336 = vld [vmem:[%s3] sm:$0xff]
        %338 = vset.pattern.permute.xlu0 0
        %339 = vperm.xlu0 %338, %v336
        %v340 = vpop.permute.xlu0 %339
        %vm342 = vcmask 31744
        %v344 = vsel %vm342, %v335, 0
        %vm346 = vcmask 1043456
        %v348 = vsel %vm346, %v334, 0
        %350 = vmatprep.subr.mxu0 0.0
        %351 = vmatpush1.msra.mxu0 %v348
        %352 = vmatprep.subr.mxu0 0.0
        %353 = vmatpush1.msra.mxu0 0.0
        %354 = vmatprep.subr.mxu0 0.0
        %355 = vmatpush1.msra.mxu0 0.0
        %356 = vmatprep.subr.mxu0 0.0
        %357 = vmatpush1.msra.mxu0 0.0
        %358 = vmatprep.subr.mxu0 0.0
        %359 = vmatpush1.msra.mxu0 0.0
        %360 = vmatprep.subr.mxu0 0.0
        %361 = vmatpush1.msra.mxu0 0.0
        %362 = vmatprep.subr.mxu0 0.0
        %363 = vmatpush1.msra.mxu0 0.0
        %364 = vmatprep.subr.mxu0 0.0
        %365 = vmatpush1.msra.mxu0 0.0
        %366 = vmatprep.subr.mxu0 0.0
        %367 = vmatpush1.msra.mxu0 0.0
        %368 = vmatprep.subr.mxu0 0.0
        %369 = vmatpush1.msra.mxu0 0.0
        %370 = vmatprep.subr.mxu0 0.0
        %371 = vmatpush1.msra.mxu0 0.0
        %372 = vmatprep.subr.mxu0 0.0
        %373 = vmatpush1.msra.mxu0 0.0
        %374 = vmatprep.subr.mxu0 0.0
        %375 = vmatpush1.msra.mxu0 0.0
        %376 = vmatprep.subr.mxu0 0.0
        %377 = vmatpush1.msra.mxu0 0.0
        %378 = vmatprep.subr.mxu0 0.0
        %379 = vmatpush1.msra.mxu0 0.0
        %380 = vmatprep.subr.mxu0 0.0
        %381 = vmatpush1.msra.mxu0 0.0
        %382 = vmatprep.subr.mxu0 0.0
        %383 = vmatpush1.msra.mxu0 0.0
        %384 = vmatprep.subr.mxu0 0.0
        %385 = vmatpush1.msra.mxu0 0.0
        %386 = vmatprep.subr.mxu0 0.0
        %387 = vmatpush1.msra.mxu0 0.0
        %388 = vmatprep.subr.mxu0 0.0
        %389 = vmatpush1.msra.mxu0 0.0
        %390 = vmatprep.subr.mxu0 0.0
        %391 = vmatpush1.msra.mxu0 0.0
        %392 = vmatprep.subr.mxu0 0.0
        %393 = vmatpush1.msra.mxu0 0.0
        %394 = vmatprep.subr.mxu0 0.0
        %395 = vmatpush1.msra.mxu0 0.0
        %396 = vmatprep.subr.mxu0 0.0
        %397 = vmatpush1.msra.mxu0 0.0
        %398 = vmatprep.subr.mxu0 0.0
        %399 = vmatpush1.msra.mxu0 0.0
        %400 = vmatprep.subr.mxu0 0.0
        %401 = vmatpush1.msra.mxu0 0.0
        %402 = vmatprep.subr.mxu0 0.0
        %403 = vmatpush1.msra.mxu0 0.0
        %404 = vmatprep.subr.mxu0 0.0
        %405 = vmatpush1.msra.mxu0 0.0
        %406 = vmatprep.subr.mxu0 0.0
        %407 = vmatpush1.msra.mxu0 0.0
        %408 = vmatprep.subr.mxu0 0.0
        %409 = vmatpush1.msra.mxu0 0.0
        %410 = vmatprep.subr.mxu0 0.0
        %411 = vmatpush1.msra.mxu0 0.0
        %412 = vmatprep.subr.mxu0 0.0
        %413 = vmatpush1.msra.mxu0 0.0
        %414 = vmatprep.mubr.f32.mxu0 0.0
        %415 = vmatmul.mubr.f32.gmra.mrb[0].mxu0 %v344
        %v416 = vpop.f32.mrb[0].mxu0
        %v417 = vadd.f32 %v340, %v416
        %v418 = vpop.f32.mrb[0].mxu0
        %419 = vdwg.mxu0
        %420 = vxpose.xlu0.b32.start [1/16] %v417, 128
        %421 = vxpose.xlu0.b32.cont [2/16] 0.0, 128
        %422 = vxpose.xlu0.b32.cont [3/16] 0.0, 128
        %423 = vxpose.xlu0.b32.cont [4/16] 0.0, 128
        %424 = vxpose.xlu0.b32.cont [5/16] 0.0, 128
        %425 = vxpose.xlu0.b32.cont [6/16] 0.0, 128
        %426 = vxpose.xlu0.b32.cont [7/16] 0.0, 128
        %427 = vxpose.xlu0.b32.cont [8/16] 0.0, 128
        %428 = vxpose.xlu0.b32.cont [9/16] 0.0, 128
        %429 = vxpose.xlu0.b32.cont [10/16] 0.0, 128
        %430 = vxpose.xlu0.b32.cont [11/16] 0.0, 128
        %431 = vxpose.xlu0.b32.cont [12/16] 0.0, 128
        %432 = vxpose.xlu0.b32.cont [13/16] 0.0, 128
        %433 = vxpose.xlu0.b32.cont [14/16] 0.0, 128
        %434 = vxpose.xlu0.b32.cont [15/16] 0.0, 128
        %435 = vxpose.xlu0.b32.end [16/16] 0.0, 128
        %v436 = vpop.trf.xlu0
        %v437 = vpop.trf.xlu0
        %v438 = vpop.trf.xlu0
        %v439 = vpop.trf.xlu0
        %v440 = vpop.trf.xlu0
        %v441 = vpop.trf.xlu0
        %v442 = vpop.trf.xlu0
        %v443 = vpop.trf.xlu0
        %v444 = vpop.trf.xlu0
        %v445 = vpop.trf.xlu0
        %v446 = vpop.trf.xlu0
        %v447 = vpop.trf.xlu0
        %v448 = vpop.trf.xlu0
        %v449 = vpop.trf.xlu0
        %v450 = vpop.trf.xlu0
        %v451 = vpop.trf.xlu0
        %v452 = vpack.c.bf16 %v437, %v436
        %v453 = vpack.c.bf16 %v439, %v438
        %v454 = vpack.c.bf16 %v441, %v440
        %v455 = vpack.c.bf16 %v443, %v442
        %v456 = vpack.c.bf16 %v445, %v444
        %v457 = vpack.c.bf16 %v447, %v446
        %v458 = vpack.c.bf16 %v449, %v448
        %v459 = vpack.c.bf16 %v451, %v450
        %vm460 = vcmask 64512
        %461 = vst.msk [vmem:[#allocation2] sm:$0xff] %vm460, %v452
        %462 = vst.msk [vmem:[#allocation2 + $0x8] sm:$0xff] %vm460, %v453
        %463 = vst.msk [vmem:[#allocation2 + $0x10] sm:$0xff] %vm460, %v454
        %464 = vst.msk [vmem:[#allocation2 + $0x18] sm:$0xff] %vm460, %v455
        %465 = vst.msk [vmem:[#allocation2 + $0x20] sm:$0xff] %vm460, %v456
        %466 = vst.msk [vmem:[#allocation2 + $0x28] sm:$0xff] %vm460, %v457
        %467 = vst.msk [vmem:[#allocation2 + $0x30] sm:$0xff] %vm460, %v458
        %468 = vst.msk [vmem:[#allocation2 + $0x38] sm:$0xff] %vm460, %v459
        %vm469 = vcmask 7168
        %470 = vst.msk [vmem:[#allocation3] sm:$0xff] %vm469, -inf
        %471 = vst.msk [vmem:[#allocation3 + $0x8] sm:$0xff] %vm469, -inf
        %472 = vst.msk [vmem:[#allocation3 + $0x10] sm:$0xff] %vm469, -inf
        %473 = vst.msk [vmem:[#allocation3 + $0x18] sm:$0xff] %vm469, -inf
        %474 = vst.msk [vmem:[#allocation3 + $0x20] sm:$0xff] %vm469, -inf
        %475 = vst.msk [vmem:[#allocation3 + $0x28] sm:$0xff] %vm469, -inf
        %476 = vst.msk [vmem:[#allocation3 + $0x30] sm:$0xff] %vm469, -inf
        %477 = vst.msk [vmem:[#allocation3 + $0x38] sm:$0xff] %vm469, -inf
        %478 = vst.msk [vmem:[#allocation3 + $0x40] sm:$0xff] %vm469, -inf
        %479 = vst.msk [vmem:[#allocation3 + $0x48] sm:$0xff] %vm469, -inf
        %480 = vst.msk [vmem:[#allocation3 + $0x50] sm:$0xff] %vm469, -inf
        %481 = vst.msk [vmem:[#allocation3 + $0x58] sm:$0xff] %vm469, -inf
        %482 = vst.msk [vmem:[#allocation3 + $0x60] sm:$0xff] %vm469, -inf
        %483 = vst.msk [vmem:[#allocation3 + $0x68] sm:$0xff] %vm469, -inf
        %484 = vst.msk [vmem:[#allocation3 + $0x70] sm:$0xff] %vm469, -inf
        %485 = vst.msk [vmem:[#allocation3 + $0x78] sm:$0xff] %vm469, -inf
        %vm486 = vcmask 72704
        %487 = vst.msk [vmem:[#allocation4] sm:$0xff] %vm486, 0.0
        %488 = vst.msk [vmem:[#allocation4 + $0x8] sm:$0xff] %vm486, 0.0
        %489 = vst.msk [vmem:[#allocation4 + $0x10] sm:$0xff] %vm486, 0.0
        %490 = vst.msk [vmem:[#allocation4 + $0x18] sm:$0xff] %vm486, 0.0
        %491 = vst.msk [vmem:[#allocation4 + $0x20] sm:$0xff] %vm486, 0.0
        %492 = vst.msk [vmem:[#allocation4 + $0x28] sm:$0xff] %vm486, 0.0
        %493 = vst.msk [vmem:[#allocation4 + $0x30] sm:$0xff] %vm486, 0.0
        %494 = vst.msk [vmem:[#allocation4 + $0x38] sm:$0xff] %vm486, 0.0
        %495 = vst.msk [vmem:[#allocation4 + $0x40] sm:$0xff] %vm486, 0.0
        %496 = vst.msk [vmem:[#allocation4 + $0x48] sm:$0xff] %vm486, 0.0
        %497 = vst.msk [vmem:[#allocation4 + $0x50] sm:$0xff] %vm486, 0.0
        %498 = vst.msk [vmem:[#allocation4 + $0x58] sm:$0xff] %vm486, 0.0
        %499 = vst.msk [vmem:[#allocation4 + $0x60] sm:$0xff] %vm486, 0.0
        %500 = vst.msk [vmem:[#allocation4 + $0x68] sm:$0xff] %vm486, 0.0
        %501 = vst.msk [vmem:[#allocation4 + $0x70] sm:$0xff] %vm486, 0.0
        %502 = vst.msk [vmem:[#allocation4 + $0x78] sm:$0xff] %vm486, 0.0
      $region48: #{tpu_custom_call.1} parent=43 // pred_fallthru
        _
      %v503 = vld [vmem:[%s317] sm:$0xff]
      %v504 = vld [vmem:[%s4] sm:$0xff]
      %v505 = vld [vmem:[%s4 + $0x8] sm:$0xff]
      %v506 = vld [vmem:[%s4 + $0x10] sm:$0x1]
      %v507 = vld [vmem:[%s5] sm:$0xff]
      %v508 = vld [vmem:[%s5 + $0x8] sm:$0xff]
      %v509 = vld [vmem:[%s5 + $0x10] sm:$0x1]
      %511 = vset.pattern.permute.xlu0 0
      %512 = vperm.xlu0 %511, %v507
      %v513 = vpop.permute.xlu0 %512
      %516 = vset.pattern.permute.xlu0 0
      %517 = vperm.xlu0 %516, %v508
      %v518 = vpop.permute.xlu0 %517
      %521 = vset.pattern.permute.xlu0 0
      %522 = vperm.xlu0 %521, %v509
      %v523 = vpop.permute.xlu0 %522
      %v526 = vcombine.high %v503, %v503
      %vm527 = vcmask 31744
      %v529 = vsel %vm527, %v504, 0
      %v532 = vsel %vm527, %v505, 0
      %v535 = vsel %vm527, %v506, 0
      %vm537 = vcmask 1043456
      %v538 = vsel %vm537, %v503, 0
      %v540 = vsel %vm537, %v526, 0
      %542 = vmatprep.subr.mxu0 %v540
      %543 = vmatpush1.msra.mxu0 %v538
      %544 = vmatprep.subr.mxu0 0.0
      %545 = vmatpush1.msra.mxu0 0.0
      %546 = vmatprep.subr.mxu0 0.0
      %547 = vmatpush1.msra.mxu0 0.0
      %548 = vmatprep.subr.mxu0 0.0
      %549 = vmatpush1.msra.mxu0 0.0
      %550 = vmatprep.subr.mxu0 0.0
      %551 = vmatpush1.msra.mxu0 0.0
      %552 = vmatprep.subr.mxu0 0.0
      %553 = vmatpush1.msra.mxu0 0.0
      %554 = vmatprep.subr.mxu0 0.0
      %555 = vmatpush1.msra.mxu0 0.0
      %556 = vmatprep.subr.mxu0 0.0
      %557 = vmatpush1.msra.mxu0 0.0
      %558 = vmatprep.subr.mxu0 0.0
      %559 = vmatpush1.msra.mxu0 0.0
      %560 = vmatprep.subr.mxu0 0.0
      %561 = vmatpush1.msra.mxu0 0.0
      %562 = vmatprep.subr.mxu0 0.0
      %563 = vmatpush1.msra.mxu0 0.0
      %564 = vmatprep.subr.mxu0 0.0
      %565 = vmatpush1.msra.mxu0 0.0
      %566 = vmatprep.subr.mxu0 0.0
      %567 = vmatpush1.msra.mxu0 0.0
      %568 = vmatprep.subr.mxu0 0.0
      %569 = vmatpush1.msra.mxu0 0.0
      %570 = vmatprep.subr.mxu0 0.0
      %571 = vmatpush1.msra.mxu0 0.0
      %572 = vmatprep.subr.mxu0 0.0
      %573 = vmatpush1.msra.mxu0 0.0
      %574 = vmatprep.subr.mxu0 0.0
      %575 = vmatpush1.msra.mxu0 0.0
      %576 = vmatprep.subr.mxu0 0.0
      %577 = vmatpush1.msra.mxu0 0.0
      %578 = vmatprep.subr.mxu0 0.0
      %579 = vmatpush1.msra.mxu0 0.0
      %580 = vmatprep.subr.mxu0 0.0
      %581 = vmatpush1.msra.mxu0 0.0
      %582 = vmatprep.subr.mxu0 0.0
      %583 = vmatpush1.msra.mxu0 0.0
      %584 = vmatprep.subr.mxu0 0.0
      %585 = vmatpush1.msra.mxu0 0.0
      %586 = vmatprep.subr.mxu0 0.0
      %587 = vmatpush1.msra.mxu0 0.0
      %588 = vmatprep.subr.mxu0 0.0
      %589 = vmatpush1.msra.mxu0 0.0
      %590 = vmatprep.subr.mxu0 0.0
      %591 = vmatpush1.msra.mxu0 0.0
      %592 = vmatprep.subr.mxu0 0.0
      %593 = vmatpush1.msra.mxu0 0.0
      %594 = vmatprep.subr.mxu0 0.0
      %595 = vmatpush1.msra.mxu0 0.0
      %596 = vmatprep.subr.mxu0 0.0
      %597 = vmatpush1.msra.mxu0 0.0
      %598 = vmatprep.subr.mxu0 0.0
      %599 = vmatpush1.msra.mxu0 0.0
      %600 = vmatprep.subr.mxu0 0.0
      %601 = vmatpush1.msra.mxu0 0.0
      %602 = vmatprep.subr.mxu0 0.0
      %603 = vmatpush1.msra.mxu0 0.0
      %604 = vmatprep.subr.mxu0 0.0
      %605 = vmatpush1.msra.mxu0 0.0
      %606 = vmatprep.mubr.f32.mxu0 0.0
      %607 = vmatmul.mubr.f32.gmra.mrb[0].mxu0 %v529
      %v608 = vpop.f32.mrb[0].mxu0
      %v609 = vadd.f32 %v513, %v608
      %v610 = vpop.f32.mrb[0].mxu0
      %v611 = vadd.f32 %v513, %v610
      %612 = vmatprep.mubr.f32.mxu0 0.0
      %613 = vmatmul.mubr.f32.gmra.mrb[0].mxu0 %v532
      %v614 = vpop.f32.mrb[0].mxu0
      %v615 = vadd.f32 %v518, %v614
      %v616 = vpop.f32.mrb[0].mxu0
      %v617 = vadd.f32 %v518, %v616
      %618 = vmatprep.mubr.f32.mxu0 0.0
      %619 = vmatmul.mubr.f32.gmra.mrb[0].mxu0 %v535
      %v620 = vpop.f32.mrb[0].mxu0
      %v621 = vadd.f32 %v523, %v620
      %v622 = vpop.f32.mrb[0].mxu0
      %v623 = vadd.f32 %v523, %v622
      %624 = vdwg.mxu0
      %v625 = vpack.c.bf16 %v609, %v609
      %v626 = vpack.c.bf16 %v611, %v611
      %v627 = vpack.c.bf16 %v621, %v615
      %v628 = vpack.c.bf16 %v623, %v617
      %v629 = vld [vmem:[#allocation2] sm:$0xff]
      %v630 = vld [vmem:[#allocation2 + $0x8] sm:$0xff]
      %v631 = vld [vmem:[#allocation2 + $0x10] sm:$0xff]
      %v632 = vld [vmem:[#allocation2 + $0x18] sm:$0xff]
      %v633 = vld [vmem:[#allocation2 + $0x20] sm:$0xff]
      %v634 = vld [vmem:[#allocation2 + $0x28] sm:$0xff]
      %v635 = vld [vmem:[#allocation2 + $0x30] sm:$0xff]
      %v636 = vld [vmem:[#allocation2 + $0x38] sm:$0xff]
      %vm637 = vcmask 64512
      %v639 = vsel %vm637, %v629, 0
      %v642 = vsel %vm637, %v630, 0
      %v645 = vsel %vm637, %v631, 0
      %v648 = vsel %vm637, %v632, 0
      %v651 = vsel %vm637, %v633, 0
      %v654 = vsel %vm637, %v634, 0
      %v657 = vsel %vm637, %v635, 0
      %v660 = vsel %vm637, %v636, 0
      %v663 = vsel %vm537, %v625, 0
      %v666 = vsel %vm537, %v626, 0
      %668 = vmatprep.subr.bf16.mxu0 %v666
      %669 = vmatpush1.bf16.msra.mxu0 %v663
      %670 = vmatprep.subr.bf16.mxu0 0
      %671 = vmatpush1.bf16.msra.mxu0 0
      %672 = vmatprep.subr.bf16.mxu0 0
      %673 = vmatpush1.bf16.msra.mxu0 0
      %674 = vmatprep.subr.bf16.mxu0 0
      %675 = vmatpush1.bf16.msra.mxu0 0
      %676 = vmatprep.subr.bf16.mxu0 0
      %677 = vmatpush1.bf16.msra.mxu0 0
      %678 = vmatprep.subr.bf16.mxu0 0
      %679 = vmatpush1.bf16.msra.mxu0 0
      %680 = vmatprep.subr.bf16.mxu0 0
      %681 = vmatpush1.bf16.msra.mxu0 0
      %682 = vmatprep.subr.bf16.mxu0 0
      %683 = vmatpush1.bf16.msra.mxu0 0
      %684 = vmatprep.subr.bf16.mxu0 0
      %685 = vmatpush1.bf16.msra.mxu0 0
      %686 = vmatprep.subr.bf16.mxu0 0
      %687 = vmatpush1.bf16.msra.mxu0 0
      %688 = vmatprep.subr.bf16.mxu0 0
      %689 = vmatpush1.bf16.msra.mxu0 0
      %690 = vmatprep.subr.bf16.mxu0 0
      %691 = vmatpush1.bf16.msra.mxu0 0
      %692 = vmatprep.subr.bf16.mxu0 0
      %693 = vmatpush1.bf16.msra.mxu0 0
      %694 = vmatprep.subr.bf16.mxu0 0
      %695 = vmatpush1.bf16.msra.mxu0 0
      %696 = vmatprep.subr.bf16.mxu0 0
      %697 = vmatpush1.bf16.msra.mxu0 0
      %698 = vmatprep.subr.bf16.mxu0 0
      %699 = vmatpush1.bf16.msra.mxu0 0
      %700 = vmatprep.mubr.bf16.mxu0 0
      %701 = vmatmul.mubr.bf16.gmra.mrb[0].mxu0 %v639
      %v702 = vpop.f32.mrb[0].mxu0
      %v703 = vadd.f32 0.0, %v702
      %v704 = vpop.f32.mrb[0].mxu0
      %v705 = vadd.f32 0.0, %v704
      %v706 = vpop.f32.mrb[0].mxu0
      %v707 = vadd.f32 0.0, %v706
      %v708 = vpop.f32.mrb[0].mxu0
      %v709 = vadd.f32 0.0, %v708
      %710 = vmatprep.mubr.bf16.mxu0 0
      %711 = vmatmul.mubr.bf16.gmra.mrb[0].mxu0 %v642
      %v712 = vpop.f32.mrb[0].mxu0
      %v713 = vadd.f32 0.0, %v712
      %v714 = vpop.f32.mrb[0].mxu0
      %v715 = vadd.f32 0.0, %v714
      %v716 = vpop.f32.mrb[0].mxu0
      %v717 = vadd.f32 0.0, %v716
      %v718 = vpop.f32.mrb[0].mxu0
      %v719 = vadd.f32 0.0, %v718
      %720 = vmatprep.mubr.bf16.mxu0 0
      %721 = vmatmul.mubr.bf16.gmra.mrb[0].mxu0 %v645
      %v722 = vpop.f32.mrb[0].mxu0
      %v723 = vadd.f32 0.0, %v722
      %v724 = vpop.f32.mrb[0].mxu0
      %v725 = vadd.f32 0.0, %v724
      %v726 = vpop.f32.mrb[0].mxu0
      %v727 = vadd.f32 0.0, %v726
      %v728 = vpop.f32.mrb[0].mxu0
      %v729 = vadd.f32 0.0, %v728
      %730 = vmatprep.mubr.bf16.mxu0 0
      %731 = vmatmul.mubr.bf16.gmra.mrb[0].mxu0 %v648
      %v732 = vpop.f32.mrb[0].mxu0
      %v733 = vadd.f32 0.0, %v732
      %v734 = vpop.f32.mrb[0].mxu0
      %v735 = vadd.f32 0.0, %v734
      %v736 = vpop.f32.mrb[0].mxu0
      %v737 = vadd.f32 0.0, %v736
      %v738 = vpop.f32.mrb[0].mxu0
      %v739 = vadd.f32 0.0, %v738
      %740 = vmatprep.mubr.bf16.mxu0 0
      %741 = vmatmul.mubr.bf16.gmra.mrb[0].mxu0 %v651
      %v742 = vpop.f32.mrb[0].mxu0
      %v743 = vadd.f32 0.0, %v742
      %v744 = vpop.f32.mrb[0].mxu0
      %v745 = vadd.f32 0.0, %v744
      %v746 = vpop.f32.mrb[0].mxu0
      %v747 = vadd.f32 0.0, %v746
      %v748 = vpop.f32.mrb[0].mxu0
      %v749 = vadd.f32 0.0, %v748
      %750 = vmatprep.mubr.bf16.mxu0 0
      %751 = vmatmul.mubr.bf16.gmra.mrb[0].mxu0 %v654
      %v752 = vpop.f32.mrb[0].mxu0
      %v753 = vadd.f32 0.0, %v752
      %v754 = vpop.f32.mrb[0].mxu0
      %v755 = vadd.f32 0.0, %v754
      %v756 = vpop.f32.mrb[0].mxu0
      %v757 = vadd.f32 0.0, %v756
      %v758 = vpop.f32.mrb[0].mxu0
      %v759 = vadd.f32 0.0, %v758
      %760 = vmatprep.mubr.bf16.mxu0 0
      %761 = vmatmul.mubr.bf16.gmra.mrb[0].mxu0 %v657
      %v762 = vpop.f32.mrb[0].mxu0
      %v763 = vadd.f32 0.0, %v762
      %v764 = vpop.f32.mrb[0].mxu0
      %v765 = vadd.f32 0.0, %v764
      %v766 = vpop.f32.mrb[0].mxu0
      %v767 = vadd.f32 0.0, %v766
      %v768 = vpop.f32.mrb[0].mxu0
      %v769 = vadd.f32 0.0, %v768
      %770 = vmatprep.mubr.bf16.mxu0 0
      %771 = vmatmul.mubr.bf16.gmra.mrb[0].mxu0 %v660
      %v772 = vpop.f32.mrb[0].mxu0
      %v773 = vadd.f32 0.0, %v772
      %v774 = vpop.f32.mrb[0].mxu0
      %v775 = vadd.f32 0.0, %v774
      %v776 = vpop.f32.mrb[0].mxu0
      %v777 = vadd.f32 0.0, %v776
      %v778 = vpop.f32.mrb[0].mxu0
      %v779 = vadd.f32 0.0, %v778
      %780 = vdwg.mxu0
      %v781 = vld [vmem:[#allocation3] sm:$0xff]
      %v782 = vld [vmem:[#allocation3 + $0x8] sm:$0xff]
      %v783 = vld [vmem:[#allocation3 + $0x10] sm:$0xff]
      %v784 = vld [vmem:[#allocation3 + $0x18] sm:$0xff]
      %v785 = vld [vmem:[#allocation3 + $0x20] sm:$0xff]
      %v786 = vld [vmem:[#allocation3 + $0x28] sm:$0xff]
      %v787 = vld [vmem:[#allocation3 + $0x30] sm:$0xff]
      %v788 = vld [vmem:[#allocation3 + $0x38] sm:$0xff]
      %v789 = vld [vmem:[#allocation3 + $0x40] sm:$0xff]
      %v790 = vld [vmem:[#allocation3 + $0x48] sm:$0xff]
      %v791 = vld [vmem:[#allocation3 + $0x50] sm:$0xff]
      %v792 = vld [vmem:[#allocation3 + $0x58] sm:$0xff]
      %v793 = vld [vmem:[#allocation3 + $0x60] sm:$0xff]
      %v794 = vld [vmem:[#allocation3 + $0x68] sm:$0xff]
      %v795 = vld [vmem:[#allocation3 + $0x70] sm:$0xff]
      %v796 = vld [vmem:[#allocation3 + $0x78] sm:$0xff]
      %v797 = vmax.f32 %v703, %v705
      %798 = vmax.xlane.f32.xlu0 %v797
      %v799 = vpop.xlane.xlu0 %798
      %v800 = vmax.f32 %v707, %v709
      %801 = vmax.xlane.f32.xlu0 %v800
      %v802 = vpop.xlane.xlu0 %801
      %v803 = vmax.f32 %v713, %v715
      %804 = vmax.xlane.f32.xlu0 %v803
      %v805 = vpop.xlane.xlu0 %804
      %v806 = vmax.f32 %v717, %v719
      %807 = vmax.xlane.f32.xlu0 %v806
      %v808 = vpop.xlane.xlu0 %807
      %v809 = vmax.f32 %v723, %v725
      %810 = vmax.xlane.f32.xlu0 %v809
      %v811 = vpop.xlane.xlu0 %810
      %v812 = vmax.f32 %v727, %v729
      %813 = vmax.xlane.f32.xlu0 %v812
      %v814 = vpop.xlane.xlu0 %813
      %v815 = vmax.f32 %v733, %v735
      %816 = vmax.xlane.f32.xlu0 %v815
      %v817 = vpop.xlane.xlu0 %816
      %v818 = vmax.f32 %v737, %v739
      %819 = vmax.xlane.f32.xlu0 %v818
      %v820 = vpop.xlane.xlu0 %819
      %v821 = vmax.f32 %v743, %v745
      %822 = vmax.xlane.f32.xlu0 %v821
      %v823 = vpop.xlane.xlu0 %822
      %v824 = vmax.f32 %v747, %v749
      %825 = vmax.xlane.f32.xlu0 %v824
      %v826 = vpop.xlane.xlu0 %825
      %v827 = vmax.f32 %v753, %v755
      %828 = vmax.xlane.f32.xlu0 %v827
      %v829 = vpop.xlane.xlu0 %828
      %v830 = vmax.f32 %v757, %v759
      %831 = vmax.xlane.f32.xlu0 %v830
      %v832 = vpop.xlane.xlu0 %831
      %v833 = vmax.f32 %v763, %v765
      %834 = vmax.xlane.f32.xlu0 %v833
      %v835 = vpop.xlane.xlu0 %834
      %v836 = vmax.f32 %v767, %v769
      %837 = vmax.xlane.f32.xlu0 %v836
      %v838 = vpop.xlane.xlu0 %837
      %v839 = vmax.f32 %v773, %v775
      %840 = vmax.xlane.f32.xlu0 %v839
      %v841 = vpop.xlane.xlu0 %840
      %v842 = vmax.f32 %v777, %v779
      %843 = vmax.xlane.f32.xlu0 %v842
      %v844 = vpop.xlane.xlu0 %843
      %v845 = vmax.f32 %v781, %v799
      %v846 = vmax.f32 %v782, %v802
      %v847 = vmax.f32 %v783, %v805
      %v848 = vmax.f32 %v784, %v808
      %v849 = vmax.f32 %v785, %v811
      %v850 = vmax.f32 %v786, %v814
      %v851 = vmax.f32 %v787, %v817
      %v852 = vmax.f32 %v788, %v820
      %v853 = vmax.f32 %v789, %v823
      %v854 = vmax.f32 %v790, %v826
      %v855 = vmax.f32 %v791, %v829
      %v856 = vmax.f32 %v792, %v832
      %v857 = vmax.f32 %v793, %v835
      %v858 = vmax.f32 %v794, %v838
      %v859 = vmax.f32 %v795, %v841
      %v860 = vmax.f32 %v796, %v844
      %v861 = vsub.f32 %v781, %v845
      %v862 = vsub.f32 %v782, %v846
      %v863 = vsub.f32 %v783, %v847
      %v864 = vsub.f32 %v784, %v848
      %v865 = vsub.f32 %v785, %v849
      %v866 = vsub.f32 %v786, %v850
      %v867 = vsub.f32 %v787, %v851
      %v868 = vsub.f32 %v788, %v852
      %v869 = vsub.f32 %v789, %v853
      %v870 = vsub.f32 %v790, %v854
      %v871 = vsub.f32 %v791, %v855
      %v872 = vsub.f32 %v792, %v856
      %v873 = vsub.f32 %v793, %v857
      %v874 = vsub.f32 %v794, %v858
      %v875 = vsub.f32 %v795, %v859
      %v876 = vsub.f32 %v796, %v860
      %v877 = vmul.f32 %v861, 1.442695
      %v878 = vpow.pop %v877
      %v879 = vmul.f32 %v862, 1.442695
      %v880 = vpow.pop %v879
      %v881 = vmul.f32 %v863, 1.442695
      %v882 = vpow.pop %v881
      %v883 = vmul.f32 %v864, 1.442695
      %v884 = vpow.pop %v883
      %v885 = vmul.f32 %v865, 1.442695
      %v886 = vpow.pop %v885
      %v887 = vmul.f32 %v866, 1.442695
      %v888 = vpow.pop %v887
      %v889 = vmul.f32 %v867, 1.442695
      %v890 = vpow.pop %v889
      %v891 = vmul.f32 %v868, 1.442695
      %v892 = vpow.pop %v891
      %v893 = vmul.f32 %v869, 1.442695
      %v894 = vpow.pop %v893
      %v895 = vmul.f32 %v870, 1.442695
      %v896 = vpow.pop %v895
      %v897 = vmul.f32 %v871, 1.442695
      %v898 = vpow.pop %v897
      %v899 = vmul.f32 %v872, 1.442695
      %v900 = vpow.pop %v899
      %v901 = vmul.f32 %v873, 1.442695
      %v902 = vpow.pop %v901
      %v903 = vmul.f32 %v874, 1.442695
      %v904 = vpow.pop %v903
      %v905 = vmul.f32 %v875, 1.442695
      %v906 = vpow.pop %v905
      %v907 = vmul.f32 %v876, 1.442695
      %v908 = vpow.pop %v907
      %910 = vset.pattern.permute.xlu0 0
      %911 = vperm.xlu0 %910, %v845
      %v912 = vpop.permute.xlu0 %911
      %915 = vset.pattern.permute.xlu0 0
      %916 = vperm.xlu0 %915, %v846
      %v917 = vpop.permute.xlu0 %916
      %920 = vset.pattern.permute.xlu0 0
      %921 = vperm.xlu0 %920, %v847
      %v922 = vpop.permute.xlu0 %921
      %925 = vset.pattern.permute.xlu0 0
      %926 = vperm.xlu0 %925, %v848
      %v927 = vpop.permute.xlu0 %926
      %930 = vset.pattern.permute.xlu0 0
      %931 = vperm.xlu0 %930, %v849
      %v932 = vpop.permute.xlu0 %931
      %935 = vset.pattern.permute.xlu0 0
      %936 = vperm.xlu0 %935, %v850
      %v937 = vpop.permute.xlu0 %936
      %940 = vset.pattern.permute.xlu0 0
      %941 = vperm.xlu0 %940, %v851
      %v942 = vpop.permute.xlu0 %941
      %945 = vset.pattern.permute.xlu0 0
      %946 = vperm.xlu0 %945, %v852
      %v947 = vpop.permute.xlu0 %946
      %950 = vset.pattern.permute.xlu0 0
      %951 = vperm.xlu0 %950, %v853
      %v952 = vpop.permute.xlu0 %951
      %955 = vset.pattern.permute.xlu0 0
      %956 = vperm.xlu0 %955, %v854
      %v957 = vpop.permute.xlu0 %956
      %960 = vset.pattern.permute.xlu0 0
      %961 = vperm.xlu0 %960, %v855
      %v962 = vpop.permute.xlu0 %961
      %965 = vset.pattern.permute.xlu0 0
      %966 = vperm.xlu0 %965, %v856
      %v967 = vpop.permute.xlu0 %966
      %970 = vset.pattern.permute.xlu0 0
      %971 = vperm.xlu0 %970, %v857
      %v972 = vpop.permute.xlu0 %971
      %975 = vset.pattern.permute.xlu0 0
      %976 = vperm.xlu0 %975, %v858
      %v977 = vpop.permute.xlu0 %976
      %980 = vset.pattern.permute.xlu0 0
      %981 = vperm.xlu0 %980, %v859
      %v982 = vpop.permute.xlu0 %981
      %985 = vset.pattern.permute.xlu0 0
      %986 = vperm.xlu0 %985, %v860
      %v987 = vpop.permute.xlu0 %986
      %v989 = vsub.f32 %v703, %v912
      %v990 = vsub.f32 %v705, %v912
      %v991 = vsub.f32 %v707, %v917
      %v992 = vsub.f32 %v709, %v917
      %v993 = vsub.f32 %v713, %v922
      %v994 = vsub.f32 %v715, %v922
      %v995 = vsub.f32 %v717, %v927
      %v996 = vsub.f32 %v719, %v927
      %v997 = vsub.f32 %v723, %v932
      %v998 = vsub.f32 %v725, %v932
      %v999 = vsub.f32 %v727, %v937
      %v1000 = vsub.f32 %v729, %v937
      %v1001 = vsub.f32 %v733, %v942
      %v1002 = vsub.f32 %v735, %v942
      %v1003 = vsub.f32 %v737, %v947
      %v1004 = vsub.f32 %v739, %v947
      %v1005 = vsub.f32 %v743, %v952
      %v1006 = vsub.f32 %v745, %v952
      %v1007 = vsub.f32 %v747, %v957
      %v1008 = vsub.f32 %v749, %v957
      %v1009 = vsub.f32 %v753, %v962
      %v1010 = vsub.f32 %v755, %v962
      %v1011 = vsub.f32 %v757, %v967
      %v1012 = vsub.f32 %v759, %v967
      %v1013 = vsub.f32 %v763, %v972
      %v1014 = vsub.f32 %v765, %v972
      %v1015 = vsub.f32 %v767, %v977
      %v1016 = vsub.f32 %v769, %v977
      %v1017 = vsub.f32 %v773, %v982
      %v1018 = vsub.f32 %v775, %v982
      %v1019 = vsub.f32 %v777, %v987
      %v1020 = vsub.f32 %v779, %v987
      %v1021 = vmul.f32 %v989, 1.442695
      %v1022 = vpow.pop %v1021
      %v1023 = vmul.f32 %v990, 1.442695
      %v1024 = vpow.pop %v1023
      %v1025 = vmul.f32 %v991, 1.442695
      %v1026 = vpow.pop %v1025
      %v1027 = vmul.f32 %v992, 1.442695
      %v1028 = vpow.pop %v1027
      %v1029 = vmul.f32 %v993, 1.442695
      %v1030 = vpow.pop %v1029
      %v1031 = vmul.f32 %v994, 1.442695
      %v1032 = vpow.pop %v1031
      %v1033 = vmul.f32 %v995, 1.442695
      %v1034 = vpow.pop %v1033
      %v1035 = vmul.f32 %v996, 1.442695
      %v1036 = vpow.pop %v1035
      %v1037 = vmul.f32 %v997, 1.442695
      %v1038 = vpow.pop %v1037
      %v1039 = vmul.f32 %v998, 1.442695
      %v1040 = vpow.pop %v1039
      %v1041 = vmul.f32 %v999, 1.442695
      %v1042 = vpow.pop %v1041
      %v1043 = vmul.f32 %v1000, 1.442695
      %v1044 = vpow.pop %v1043
      %v1045 = vmul.f32 %v1001, 1.442695
      %v1046 = vpow.pop %v1045
      %v1047 = vmul.f32 %v1002, 1.442695
      %v1048 = vpow.pop %v1047
      %v1049 = vmul.f32 %v1003, 1.442695
      %v1050 = vpow.pop %v1049
      %v1051 = vmul.f32 %v1004, 1.442695
      %v1052 = vpow.pop %v1051
      %v1053 = vmul.f32 %v1005, 1.442695
      %v1054 = vpow.pop %v1053
      %v1055 = vmul.f32 %v1006, 1.442695
      %v1056 = vpow.pop %v1055
      %v1057 = vmul.f32 %v1007, 1.442695
      %v1058 = vpow.pop %v1057
      %v1059 = vmul.f32 %v1008, 1.442695
      %v1060 = vpow.pop %v1059
      %v1061 = vmul.f32 %v1009, 1.442695
      %v1062 = vpow.pop %v1061
      %v1063 = vmul.f32 %v1010, 1.442695
      %v1064 = vpow.pop %v1063
      %v1065 = vmul.f32 %v1011, 1.442695
      %v1066 = vpow.pop %v1065
      %v1067 = vmul.f32 %v1012, 1.442695
      %v1068 = vpow.pop %v1067
      %v1069 = vmul.f32 %v1013, 1.442695
      %v1070 = vpow.pop %v1069
      %v1071 = vmul.f32 %v1014, 1.442695
      %v1072 = vpow.pop %v1071
      %v1073 = vmul.f32 %v1015, 1.442695
      %v1074 = vpow.pop %v1073
      %v1075 = vmul.f32 %v1016, 1.442695
      %v1076 = vpow.pop %v1075
      %v1077 = vmul.f32 %v1017, 1.442695
      %v1078 = vpow.pop %v1077
      %v1079 = vmul.f32 %v1018, 1.442695
      %v1080 = vpow.pop %v1079
      %v1081 = vmul.f32 %v1019, 1.442695
      %v1082 = vpow.pop %v1081
      %v1083 = vmul.f32 %v1020, 1.442695
      %v1084 = vpow.pop %v1083
      %v1085 = vpack.c.bf16 %v1026, %v1022
      %v1086 = vpack.c.bf16 %v1028, %v1024
      %v1087 = vpack.c.bf16 %v1034, %v1030
      %v1088 = vpack.c.bf16 %v1036, %v1032
      %v1089 = vpack.c.bf16 %v1042, %v1038
      %v1090 = vpack.c.bf16 %v1044, %v1040
      %v1091 = vpack.c.bf16 %v1050, %v1046
      %v1092 = vpack.c.bf16 %v1052, %v1048
      %v1093 = vpack.c.bf16 %v1058, %v1054
      %v1094 = vpack.c.bf16 %v1060, %v1056
      %v1095 = vpack.c.bf16 %v1066, %v1062
      %v1096 = vpack.c.bf16 %v1068, %v1064
      %v1097 = vpack.c.bf16 %v1074, %v1070
      %v1098 = vpack.c.bf16 %v1076, %v1072
      %v1099 = vpack.c.bf16 %v1082, %v1078
      %v1100 = vpack.c.bf16 %v1084, %v1080
      %1101 = vmatprep.subr.bf16.mxu0 %v628
      %1102 = vmatpush1.bf16.xpose.msra.mxu0 %v627
      %1103 = vmatprep.subr.bf16.mxu0 0
      %1104 = vmatpush1.bf16.xpose.msra.mxu0 0
      %1105 = vmatprep.subr.bf16.mxu0 0
      %1106 = vmatpush1.bf16.xpose.msra.mxu0 0
      %1107 = vmatprep.subr.bf16.mxu0 0
      %1108 = vmatpush1.bf16.xpose.msra.mxu0 0
      %1109 = vmatprep.subr.bf16.mxu0 0
      %1110 = vmatpush1.bf16.xpose.msra.mxu0 0
      %1111 = vmatprep.subr.bf16.mxu0 0
      %1112 = vmatpush1.bf16.xpose.msra.mxu0 0
      %1113 = vmatprep.subr.bf16.mxu0 0
      %1114 = vmatpush1.bf16.xpose.msra.mxu0 0
      %1115 = vmatprep.subr.bf16.mxu0 0
      %1116 = vmatpush1.bf16.xpose.msra.mxu0 0
      %1117 = vmatprep.subr.bf16.mxu0 0
      %1118 = vmatpush1.bf16.xpose.msra.mxu0 0
      %1119 = vmatprep.subr.bf16.mxu0 0
      %1120 = vmatpush1.bf16.xpose.msra.mxu0 0
      %1121 = vmatprep.subr.bf16.mxu0 0
      %1122 = vmatpush1.bf16.xpose.msra.mxu0 0
      %1123 = vmatprep.subr.bf16.mxu0 0
      %1124 = vmatpush1.bf16.xpose.msra.mxu0 0
      %1125 = vmatprep.subr.bf16.mxu0 0
      %1126 = vmatpush1.bf16.xpose.msra.mxu0 0
      %1127 = vmatprep.subr.bf16.mxu0 0
      %1128 = vmatpush1.bf16.xpose.msra.mxu0 0
      %1129 = vmatprep.subr.bf16.mxu0 0
      %1130 = vmatpush1.bf16.xpose.msra.mxu0 0
      %1131 = vmatprep.subr.bf16.mxu0 0
      %1132 = vmatpush1.bf16.xpose.msra.mxu0 0
      %1133 = vmatprep.mubr.bf16.mxu0 %v1086
      %1134 = vmatmul.mubr.bf16.gmra.mrb[0].mxu0 %v1085
      %v1135 = vpop.f32.mrb[0].mxu0
      %v1136 = vadd.f32 0.0, %v1135
      %v1137 = vpop.f32.mrb[0].mxu0
      %v1138 = vpop.f32.mrb[0].mxu0
      %v1139 = vadd.f32 0.0, %v1138
      %v1140 = vpop.f32.mrb[0].mxu0
      %1141 = vmatprep.mubr.bf16.mxu0 %v1088
      %1142 = vmatmul.mubr.bf16.gmra.mrb[0].mxu0 %v1087
      %v1143 = vpop.f32.mrb[0].mxu0
      %v1144 = vadd.f32 0.0, %v1143
      %v1145 = vpop.f32.mrb[0].mxu0
      %v1146 = vpop.f32.mrb[0].mxu0
      %v1147 = vadd.f32 0.0, %v1146
      %v1148 = vpop.f32.mrb[0].mxu0
      %1149 = vmatprep.mubr.bf16.mxu0 %v1090
      %1150 = vmatmul.mubr.bf16.gmra.mrb[0].mxu0 %v1089
      %v1151 = vpop.f32.mrb[0].mxu0
      %v1152 = vadd.f32 0.0, %v1151
      %v1153 = vpop.f32.mrb[0].mxu0
      %v1154 = vpop.f32.mrb[0].mxu0
      %v1155 = vadd.f32 0.0, %v1154
      %v1156 = vpop.f32.mrb[0].mxu0
      %1157 = vmatprep.mubr.bf16.mxu0 %v1092
      %1158 = vmatmul.mubr.bf16.gmra.mrb[0].mxu0 %v1091
      %v1159 = vpop.f32.mrb[0].mxu0
      %v1160 = vadd.f32 0.0, %v1159
      %v1161 = vpop.f32.mrb[0].mxu0
      %v1162 = vpop.f32.mrb[0].mxu0
      %v1163 = vadd.f32 0.0, %v1162
      %v1164 = vpop.f32.mrb[0].mxu0
      %1165 = vmatprep.mubr.bf16.mxu0 %v1094
      %1166 = vmatmul.mubr.bf16.gmra.mrb[0].mxu0 %v1093
      %v1167 = vpop.f32.mrb[0].mxu0
      %v1168 = vadd.f32 0.0, %v1167
      %v1169 = vpop.f32.mrb[0].mxu0
      %v1170 = vpop.f32.mrb[0].mxu0
      %v1171 = vadd.f32 0.0, %v1170
      %v1172 = vpop.f32.mrb[0].mxu0
      %1173 = vmatprep.mubr.bf16.mxu0 %v1096
      %1174 = vmatmul.mubr.bf16.gmra.mrb[0].mxu0 %v1095
      %v1175 = vpop.f32.mrb[0].mxu0
      %v1176 = vadd.f32 0.0, %v1175
      %v1177 = vpop.f32.mrb[0].mxu0
      %v1178 = vpop.f32.mrb[0].mxu0
      %v1179 = vadd.f32 0.0, %v1178
      %v1180 = vpop.f32.mrb[0].mxu0
      %1181 = vmatprep.mubr.bf16.mxu0 %v1098
      %1182 = vmatmul.mubr.bf16.gmra.mrb[0].mxu0 %v1097
      %v1183 = vpop.f32.mrb[0].mxu0
      %v1184 = vadd.f32 0.0, %v1183
      %v1185 = vpop.f32.mrb[0].mxu0
      %v1186 = vpop.f32.mrb[0].mxu0
      %v1187 = vadd.f32 0.0, %v1186
      %v1188 = vpop.f32.mrb[0].mxu0
      %1189 = vmatprep.mubr.bf16.mxu0 %v1100
      %1190 = vmatmul.mubr.bf16.gmra.mrb[0].mxu0 %v1099
      %v1191 = vpop.f32.mrb[0].mxu0
      %v1192 = vadd.f32 0.0, %v1191
      %v1193 = vpop.f32.mrb[0].mxu0
      %v1194 = vpop.f32.mrb[0].mxu0
      %v1195 = vadd.f32 0.0, %v1194
      %v1196 = vpop.f32.mrb[0].mxu0
      %1197 = vdwg.mxu0
      %v1198 = vld [vmem:[#allocation4] sm:$0xff]
      %v1199 = vld [vmem:[#allocation4 + $0x8] sm:$0xff]
      %v1200 = vld [vmem:[#allocation4 + $0x10] sm:$0xff]
      %v1201 = vld [vmem:[#allocation4 + $0x18] sm:$0xff]
      %v1202 = vld [vmem:[#allocation4 + $0x20] sm:$0xff]
      %v1203 = vld [vmem:[#allocation4 + $0x28] sm:$0xff]
      %v1204 = vld [vmem:[#allocation4 + $0x30] sm:$0xff]
      %v1205 = vld [vmem:[#allocation4 + $0x38] sm:$0xff]
      %v1206 = vld [vmem:[#allocation4 + $0x40] sm:$0xff]
      %v1207 = vld [vmem:[#allocation4 + $0x48] sm:$0xff]
      %v1208 = vld [vmem:[#allocation4 + $0x50] sm:$0xff]
      %v1209 = vld [vmem:[#allocation4 + $0x58] sm:$0xff]
      %v1210 = vld [vmem:[#allocation4 + $0x60] sm:$0xff]
      %v1211 = vld [vmem:[#allocation4 + $0x68] sm:$0xff]
      %v1212 = vld [vmem:[#allocation4 + $0x70] sm:$0xff]
      %v1213 = vld [vmem:[#allocation4 + $0x78] sm:$0xff]
      %1215 = vset.pattern.permute.xlu0 0
      %1216 = vperm.xlu0 %1215, %v878
      %v1217 = vpop.permute.xlu0 %1216
      %1220 = vset.pattern.permute.xlu0 0
      %1221 = vperm.xlu0 %1220, %v880
      %v1222 = vpop.permute.xlu0 %1221
      %1225 = vset.pattern.permute.xlu0 0
      %1226 = vperm.xlu0 %1225, %v882
      %v1227 = vpop.permute.xlu0 %1226
      %1230 = vset.pattern.permute.xlu0 0
      %1231 = vperm.xlu0 %1230, %v884
      %v1232 = vpop.permute.xlu0 %1231
      %1235 = vset.pattern.permute.xlu0 0
      %1236 = vperm.xlu0 %1235, %v886
      %v1237 = vpop.permute.xlu0 %1236
      %1240 = vset.pattern.permute.xlu0 0
      %1241 = vperm.xlu0 %1240, %v888
      %v1242 = vpop.permute.xlu0 %1241
      %1245 = vset.pattern.permute.xlu0 0
      %1246 = vperm.xlu0 %1245, %v890
      %v1247 = vpop.permute.xlu0 %1246
      %1250 = vset.pattern.permute.xlu0 0
      %1251 = vperm.xlu0 %1250, %v892
      %v1252 = vpop.permute.xlu0 %1251
      %1255 = vset.pattern.permute.xlu0 0
      %1256 = vperm.xlu0 %1255, %v894
      %v1257 = vpop.permute.xlu0 %1256
      %1260 = vset.pattern.permute.xlu0 0
      %1261 = vperm.xlu0 %1260, %v896
      %v1262 = vpop.permute.xlu0 %1261
      %1265 = vset.pattern.permute.xlu0 0
      %1266 = vperm.xlu0 %1265, %v898
      %v1267 = vpop.permute.xlu0 %1266
      %1270 = vset.pattern.permute.xlu0 0
      %1271 = vperm.xlu0 %1270, %v900
      %v1272 = vpop.permute.xlu0 %1271
      %1275 = vset.pattern.permute.xlu0 0
      %1276 = vperm.xlu0 %1275, %v902
      %v1277 = vpop.permute.xlu0 %1276
      %1280 = vset.pattern.permute.xlu0 0
      %1281 = vperm.xlu0 %1280, %v904
      %v1282 = vpop.permute.xlu0 %1281
      %1285 = vset.pattern.permute.xlu0 0
      %1286 = vperm.xlu0 %1285, %v906
      %v1287 = vpop.permute.xlu0 %1286
      %1290 = vset.pattern.permute.xlu0 0
      %1291 = vperm.xlu0 %1290, %v908
      %v1292 = vpop.permute.xlu0 %1291
      %v1294 = vmul.f32 %v1217, %v1198
      %v1295 = vmul.f32 %v1222, %v1199
      %v1296 = vmul.f32 %v1227, %v1200
      %v1297 = vmul.f32 %v1232, %v1201
      %v1298 = vmul.f32 %v1237, %v1202
      %v1299 = vmul.f32 %v1242, %v1203
      %v1300 = vmul.f32 %v1247, %v1204
      %v1301 = vmul.f32 %v1252, %v1205
      %v1302 = vmul.f32 %v1257, %v1206
      %v1303 = vmul.f32 %v1262, %v1207
      %v1304 = vmul.f32 %v1267, %v1208
      %v1305 = vmul.f32 %v1272, %v1209
      %v1306 = vmul.f32 %v1277, %v1210
      %v1307 = vmul.f32 %v1282, %v1211
      %v1308 = vmul.f32 %v1287, %v1212
      %v1309 = vmul.f32 %v1292, %v1213
      %v1310 = vadd.f32 %v1294, %v1136
      %v1311 = vadd.f32 %v1295, %v1139
      %v1312 = vadd.f32 %v1296, %v1144
      %v1313 = vadd.f32 %v1297, %v1147
      %v1314 = vadd.f32 %v1298, %v1152
      %v1315 = vadd.f32 %v1299, %v1155
      %v1316 = vadd.f32 %v1300, %v1160
      %v1317 = vadd.f32 %v1301, %v1163
      %v1318 = vadd.f32 %v1302, %v1168
      %v1319 = vadd.f32 %v1303, %v1171
      %v1320 = vadd.f32 %v1304, %v1176
      %v1321 = vadd.f32 %v1305, %v1179
      %v1322 = vadd.f32 %v1306, %v1184
      %v1323 = vadd.f32 %v1307, %v1187
      %v1324 = vadd.f32 %v1308, %v1192
      %v1325 = vadd.f32 %v1309, %v1195
      %vm1326 = vcmask 72704
      %1327 = vst.msk [vmem:[#allocation4] sm:$0xff] %vm1326, %v1310
      %1328 = vst.msk [vmem:[#allocation4 + $0x8] sm:$0xff] %vm1326, %v1311
      %1329 = vst.msk [vmem:[#allocation4 + $0x10] sm:$0xff] %vm1326, %v1312
      %1330 = vst.msk [vmem:[#allocation4 + $0x18] sm:$0xff] %vm1326, %v1313
      %1331 = vst.msk [vmem:[#allocation4 + $0x20] sm:$0xff] %vm1326, %v1314
      %1332 = vst.msk [vmem:[#allocation4 + $0x28] sm:$0xff] %vm1326, %v1315
      %1333 = vst.msk [vmem:[#allocation4 + $0x30] sm:$0xff] %vm1326, %v1316
      %1334 = vst.msk [vmem:[#allocation4 + $0x38] sm:$0xff] %vm1326, %v1317
      %1335 = vst.msk [vmem:[#allocation4 + $0x40] sm:$0xff] %vm1326, %v1318
      %1336 = vst.msk [vmem:[#allocation4 + $0x48] sm:$0xff] %vm1326, %v1319
      %1337 = vst.msk [vmem:[#allocation4 + $0x50] sm:$0xff] %vm1326, %v1320
      %1338 = vst.msk [vmem:[#allocation4 + $0x58] sm:$0xff] %vm1326, %v1321
      %1339 = vst.msk [vmem:[#allocation4 + $0x60] sm:$0xff] %vm1326, %v1322
      %1340 = vst.msk [vmem:[#allocation4 + $0x68] sm:$0xff] %vm1326, %v1323
      %1341 = vst.msk [vmem:[#allocation4 + $0x70] sm:$0xff] %vm1326, %v1324
      %1342 = vst.msk [vmem:[#allocation4 + $0x78] sm:$0xff] %vm1326, %v1325
      %vm1343 = vcmask 7168
      %1344 = vst.msk [vmem:[#allocation3] sm:$0xff] %vm1343, %v845
      %1345 = vst.msk [vmem:[#allocation3 + $0x8] sm:$0xff] %vm1343, %v846
      %1346 = vst.msk [vmem:[#allocation3 + $0x10] sm:$0xff] %vm1343, %v847
      %1347 = vst.msk [vmem:[#allocation3 + $0x18] sm:$0xff] %vm1343, %v848
      %1348 = vst.msk [vmem:[#allocation3 + $0x20] sm:$0xff] %vm1343, %v849
      %1349 = vst.msk [vmem:[#allocation3 + $0x28] sm:$0xff] %vm1343, %v850
      %1350 = vst.msk [vmem:[#allocation3 + $0x30] sm:$0xff] %vm1343, %v851
      %1351 = vst.msk [vmem:[#allocation3 + $0x38] sm:$0xff] %vm1343, %v852
      %1352 = vst.msk [vmem:[#allocation3 + $0x40] sm:$0xff] %vm1343, %v853
      %1353 = vst.msk [vmem:[#allocation3 + $0x48] sm:$0xff] %vm1343, %v854
      %1354 = vst.msk [vmem:[#allocation3 + $0x50] sm:$0xff] %vm1343, %v855
      %1355 = vst.msk [vmem:[#allocation3 + $0x58] sm:$0xff] %vm1343, %v856
      %1356 = vst.msk [vmem:[#allocation3 + $0x60] sm:$0xff] %vm1343, %v857
      %1357 = vst.msk [vmem:[#allocation3 + $0x68] sm:$0xff] %vm1343, %v858
      %1358 = vst.msk [vmem:[#allocation3 + $0x70] sm:$0xff] %vm1343, %v859
      %1359 = vst.msk [vmem:[#allocation3 + $0x78] sm:$0xff] %vm1343, %v860
      %p1360 = scmp.eq.s32.totalorder %s24, 1
      // Predicated region
      $region49: #{tpu_custom_call.1} parent=43 // pred_check
        %p1361 = pneg %p1360
      $region50: #{tpu_custom_call.1} parent=43 // pred_check_branch
        %1363 = sbr.rel (%p1361) target = $region52
      $region51: #{tpu_custom_call.1} parent=43 // pred_region
        %v1364 = vld [vmem:[#allocation4] sm:$0xff]
        %v1365 = vld [vmem:[#allocation4 + $0x8] sm:$0xff]
        %v1366 = vld [vmem:[#allocation4 + $0x10] sm:$0xff]
        %v1367 = vld [vmem:[#allocation4 + $0x18] sm:$0xff]
        %v1368 = vld [vmem:[#allocation4 + $0x20] sm:$0xff]
        %v1369 = vld [vmem:[#allocation4 + $0x28] sm:$0xff]
        %v1370 = vld [vmem:[#allocation4 + $0x30] sm:$0xff]
        %v1371 = vld [vmem:[#allocation4 + $0x38] sm:$0xff]
        %v1372 = vld [vmem:[#allocation4 + $0x40] sm:$0xff]
        %v1373 = vld [vmem:[#allocation4 + $0x48] sm:$0xff]
        %v1374 = vld [vmem:[#allocation4 + $0x50] sm:$0xff]
        %v1375 = vld [vmem:[#allocation4 + $0x58] sm:$0xff]
        %v1376 = vld [vmem:[#allocation4 + $0x60] sm:$0xff]
        %v1377 = vld [vmem:[#allocation4 + $0x68] sm:$0xff]
        %v1378 = vld [vmem:[#allocation4 + $0x70] sm:$0xff]
        %v1379 = vld [vmem:[#allocation4 + $0x78] sm:$0xff]
        %v1380 = vrcp.pop %v1364
        %v1381 = vrcp.pop %v1365
        %v1382 = vrcp.pop %v1366
        %v1383 = vrcp.pop %v1367
        %v1384 = vrcp.pop %v1368
        %v1385 = vrcp.pop %v1369
        %v1386 = vrcp.pop %v1370
        %v1387 = vrcp.pop %v1371
        %v1388 = vrcp.pop %v1372
        %v1389 = vrcp.pop %v1373
        %v1390 = vrcp.pop %v1374
        %v1391 = vrcp.pop %v1375
        %v1392 = vrcp.pop %v1376
        %v1393 = vrcp.pop %v1377
        %v1394 = vrcp.pop %v1378
        %v1395 = vrcp.pop %v1379
        %1397 = vset.pattern.permute.xlu0 8
        %1398 = vperm.xlu0 %1397, %v1380
        %v1399 = vpop.permute.xlu0 %1398
        %1402 = vset.pattern.permute.xlu0 8
        %1403 = vperm.xlu0 %1402, %v1381
        %v1404 = vpop.permute.xlu0 %1403
        %1407 = vset.pattern.permute.xlu0 8
        %1408 = vperm.xlu0 %1407, %v1382
        %v1409 = vpop.permute.xlu0 %1408
        %1412 = vset.pattern.permute.xlu0 8
        %1413 = vperm.xlu0 %1412, %v1383
        %v1414 = vpop.permute.xlu0 %1413
        %1417 = vset.pattern.permute.xlu0 8
        %1418 = vperm.xlu0 %1417, %v1384
        %v1419 = vpop.permute.xlu0 %1418
        %1422 = vset.pattern.permute.xlu0 8
        %1423 = vperm.xlu0 %1422, %v1385
        %v1424 = vpop.permute.xlu0 %1423
        %1427 = vset.pattern.permute.xlu0 8
        %1428 = vperm.xlu0 %1427, %v1386
        %v1429 = vpop.permute.xlu0 %1428
        %1432 = vset.pattern.permute.xlu0 8
        %1433 = vperm.xlu0 %1432, %v1387
        %v1434 = vpop.permute.xlu0 %1433
        %1437 = vset.pattern.permute.xlu0 8
        %1438 = vperm.xlu0 %1437, %v1388
        %v1439 = vpop.permute.xlu0 %1438
        %1442 = vset.pattern.permute.xlu0 8
        %1443 = vperm.xlu0 %1442, %v1389
        %v1444 = vpop.permute.xlu0 %1443
        %1447 = vset.pattern.permute.xlu0 8
        %1448 = vperm.xlu0 %1447, %v1390
        %v1449 = vpop.permute.xlu0 %1448
        %1452 = vset.pattern.permute.xlu0 8
        %1453 = vperm.xlu0 %1452, %v1391
        %v1454 = vpop.permute.xlu0 %1453
        %1457 = vset.pattern.permute.xlu0 8
        %1458 = vperm.xlu0 %1457, %v1392
        %v1459 = vpop.permute.xlu0 %1458
        %1462 = vset.pattern.permute.xlu0 8
        %1463 = vperm.xlu0 %1462, %v1393
        %v1464 = vpop.permute.xlu0 %1463
        %1467 = vset.pattern.permute.xlu0 8
        %1468 = vperm.xlu0 %1467, %v1394
        %v1469 = vpop.permute.xlu0 %1468
        %1472 = vset.pattern.permute.xlu0 8
        %1473 = vperm.xlu0 %1472, %v1395
        %v1474 = vpop.permute.xlu0 %1473
        %v1476 = vmul.f32 %v1364, %v1399
        %v1477 = vmul.f32 %v1365, %v1404
        %v1478 = vmul.f32 %v1366, %v1409
        %v1479 = vmul.f32 %v1367, %v1414
        %v1480 = vmul.f32 %v1368, %v1419
        %v1481 = vmul.f32 %v1369, %v1424
        %v1482 = vmul.f32 %v1370, %v1429
        %v1483 = vmul.f32 %v1371, %v1434
        %v1484 = vmul.f32 %v1372, %v1439
        %v1485 = vmul.f32 %v1373, %v1444
        %v1486 = vmul.f32 %v1374, %v1449
        %v1487 = vmul.f32 %v1375, %v1454
        %v1488 = vmul.f32 %v1376, %v1459
        %v1489 = vmul.f32 %v1377, %v1464
        %v1490 = vmul.f32 %v1378, %v1469
        %v1491 = vmul.f32 %v1379, %v1474
        %v1492 = vpack.c.bf16 %v1477, %v1476
        %v1493 = vpack.c.bf16 %v1479, %v1478
        %v1494 = vpack.c.bf16 %v1481, %v1480
        %v1495 = vpack.c.bf16 %v1483, %v1482
        %v1496 = vpack.c.bf16 %v1485, %v1484
        %v1497 = vpack.c.bf16 %v1487, %v1486
        %v1498 = vpack.c.bf16 %v1489, %v1488
        %v1499 = vpack.c.bf16 %v1491, %v1490
        %v1508 = vunpack.c.l.b16 %v1492
        %v1509 = vunpack.c.h.b16 %v1492
        %v1510 = vunpack.c.l.b16 %v1493
        %v1511 = vunpack.c.h.b16 %v1493
        %v1512 = vunpack.c.l.b16 %v1494
        %v1513 = vunpack.c.h.b16 %v1494
        %v1514 = vunpack.c.l.b16 %v1495
        %v1515 = vunpack.c.h.b16 %v1495
        %v1516 = vunpack.c.l.b16 %v1496
        %v1517 = vunpack.c.h.b16 %v1496
        %v1518 = vunpack.c.l.b16 %v1497
        %v1519 = vunpack.c.h.b16 %v1497
        %v1520 = vunpack.c.l.b16 %v1498
        %v1521 = vunpack.c.h.b16 %v1498
        %v1522 = vunpack.c.l.b16 %v1499
        %v1523 = vunpack.c.h.b16 %v1499
        %v1524 = vpack.c.b16 %v1508, %v1508
        %v1525 = vpack.c.b16 %v1509, %v1509
        %v1526 = vpack.c.b16 %v1510, %v1510
        %v1527 = vpack.c.b16 %v1511, %v1511
        %v1528 = vpack.c.b16 %v1512, %v1512
        %v1529 = vpack.c.b16 %v1513, %v1513
        %v1530 = vpack.c.b16 %v1514, %v1514
        %v1531 = vpack.c.b16 %v1515, %v1515
        %v1532 = vpack.c.b16 %v1516, %v1516
        %v1533 = vpack.c.b16 %v1517, %v1517
        %v1534 = vpack.c.b16 %v1518, %v1518
        %v1535 = vpack.c.b16 %v1519, %v1519
        %v1536 = vpack.c.b16 %v1520, %v1520
        %v1537 = vpack.c.b16 %v1521, %v1521
        %v1538 = vpack.c.b16 %v1522, %v1522
        %v1539 = vpack.c.b16 %v1523, %v1523
        %vm1556 = vcmask 60416
        %1557 = vst.msk [vmem:[%s327] sm:$0xf] %vm1556, %v1524
        %1558 = vst.msk [vmem:[%s327 + $0x4] sm:$0xf] %vm1556, %v1525
        %1559 = vst.msk [vmem:[%s327 + $0x8] sm:$0xf] %vm1556, %v1526
        %1560 = vst.msk [vmem:[%s327 + $0xc] sm:$0xf] %vm1556, %v1527
        %1561 = vst.msk [vmem:[%s327 + $0x10] sm:$0xf] %vm1556, %v1528
        %1562 = vst.msk [vmem:[%s327 + $0x14] sm:$0xf] %vm1556, %v1529
        %1563 = vst.msk [vmem:[%s327 + $0x18] sm:$0xf] %vm1556, %v1530
        %1564 = vst.msk [vmem:[%s327 + $0x1c] sm:$0xf] %vm1556, %v1531
        %1565 = vst.msk [vmem:[%s327 + $0x20] sm:$0xf] %vm1556, %v1532
        %1566 = vst.msk [vmem:[%s327 + $0x24] sm:$0xf] %vm1556, %v1533
        %1567 = vst.msk [vmem:[%s327 + $0x28] sm:$0xf] %vm1556, %v1534
        %1568 = vst.msk [vmem:[%s327 + $0x2c] sm:$0xf] %vm1556, %v1535
        %1569 = vst.msk [vmem:[%s327 + $0x30] sm:$0xf] %vm1556, %v1536
        %1570 = vst.msk [vmem:[%s327 + $0x34] sm:$0xf] %vm1556, %v1537
        %1571 = vst.msk [vmem:[%s327 + $0x38] sm:$0xf] %vm1556, %v1538
        %1572 = vst.msk [vmem:[%s327 + $0x3c] sm:$0xf] %vm1556, %v1539
      $region52: #{tpu_custom_call.1} parent=43 // pred_fallthru
        _
      %s1573 = smul.u32 16, %s23
      %p1574 = scmp.lt.s32.totalorder %s22, 1
      %s1575 = scalar_select %p1574, %s22, 1
      %p1576 = scmp.lt.s32.totalorder %s1573, 63
      %s1577 = scalar_select %p1576, %s1573, 63
      %s1578 = smul.addr %s1575, 64
      %s1579 = sadd.s32 %s1577, %s1578
      %s1580 = smul.addr %s1579, 4
      %s1581 = scalar_lea.vmem %s6, %s1580
      // Predicated region
      $region53: #{tpu_custom_call.1} parent=43 // pred_check
        %p1582 = pneg %p196
      $region54: #{tpu_custom_call.1} parent=43 // pred_check_branch
        %1584 = sbr.rel (%p1582) target = $region56
      $region55: #{tpu_custom_call.1} parent=43 // pred_region
        %s1585 = smul.u32 16, %s23
      $region56: #{tpu_custom_call.1} parent=43 // pred_fallthru
        _
    $region44: #{tpu_custom_call.1} parent=5 // pred_fallthru
      _
    %p1586 = scmp.le.s32.totalorder 2, %s12
    // Predicated region
    $region57: #{tpu_custom_call.1} parent=5 // pred_check
      %p1587 = pneg %p1586
    $region58: #{tpu_custom_call.1} parent=5 // pred_check_branch
      %1589 = sbr.rel (%p1587) target = $region60
    $region59: #{tpu_custom_call.1} parent=5 // pred_region
      %s1590 = ssub.s32 %s12, 2
      // Predicated region
      $region61: #{tpu_custom_call.1} parent=59 // pred_check
        %p1591 = pneg %p202
      $region62: #{tpu_custom_call.1} parent=59 // pred_check_branch
        %1593 = sbr.rel (%p1591) target = $region64
      $region63: #{tpu_custom_call.1} parent=59 // pred_region
        %s1594 = smul.u32 16, %s26
        %p1595 = scmp.lt.s32.totalorder %s25, 1
        %s1596 = scalar_select %p1595, %s25, 1
        %p1597 = scmp.lt.s32.totalorder %s1594, 63
        %s1598 = scalar_select %p1597, %s1594, 63
        %s1599 = smul.addr %s1596, 64
        %s1600 = sadd.s32 %s1598, %s1599
        %s1601 = smul.addr %s1600, 4
        %s1602 = scalar_lea.vmem %s6, %s1601
      $region64: #{tpu_custom_call.1} parent=59 // pred_fallthru
        _
    $region60: #{tpu_custom_call.1} parent=5 // pred_fallthru
      _
  $region6: #{tpu_custom_call.1} parent=0 // loop_footer
    %s16 = sadd.s32 1, %s12
  $region7: #{tpu_custom_call.1} parent=0 // loop_footer_branch
    %11 = sbr.rel target = $region3
  $region8: #{tpu_custom_call.1} parent=0 // loop_exit
    _

</llo_original>
